<compile_context>
chip_gen: v7x
topology: tpu7x:2x2x1
jax: 0.10.0
libtpu: 0.0.40
codegen_flags: <defaults>
</compile_context>

<pallas_src>
import functools

import jax
import jax.numpy as jnp
from jax import lax
from jax.experimental import pallas as pl
from jax.experimental.pallas import tpu as pltpu


def _round_up(x, m):
    return ((x + m - 1) // m) * m


def _default_table_limit_bytes():
    # Per-TensorCore budget for keeping the table VMEM-resident (each core holds
    # its own copy under megacore sharding).  Leaves room for the out tile, the
    # f32 accumulator and one V-chunk of one-hot.
    try:
        kind = jax.devices()[0].device_kind.lower()
    except Exception:
        return 12 * (1 << 20)
    if "v7" in kind:
        return 14 * (1 << 20)     # 64 MiB physical / 32 MiB scoped per TC
    if "v6" in kind:
        return 28 * (1 << 20)     # 128 MiB VMEM: move mid-size vocabs to Path A
    if "v5" in kind:
        return 12 * (1 << 20)     # 16 MiB scoped default is tight on v5e
    return 12 * (1 << 20)


# ---------------------------------------------------------------------------
# Path A: small/mid vocab — table resident in VMEM, V-chunked one-hot on MXU.
# ---------------------------------------------------------------------------
def _vmem_table_kernel(ids_ref, table_ref, out_ref, acc_ref, *,
                       v_chunk, compute_dtype, precision):
    # ids_ref: (T, 1) int32, table_ref: (V, D), out_ref: (T, D), acc_ref: (T, D) f32
    T, _ = out_ref.shape
    V = table_ref.shape[0]
    ids = ids_ref[...]                                   # (T, 1) int32
    acc_ref[...] = jnp.zeros_like(acc_ref)

    def accumulate(start, size):
        tab = table_ref[pl.ds(start, size), :].astype(compute_dtype)
        iota = lax.broadcasted_iota(jnp.int32, (T, size), 1) + start
        # Exactly one 1.0 per row -> the matmul is an exact row gather
        # (f32 accumulation; precision=HIGHEST for f32 tables keeps it bit-exact).
        onehot = (ids == iota).astype(compute_dtype)
        acc_ref[...] += jnp.dot(onehot, tab,
                                preferred_element_type=jnp.float32,
                                precision=precision)

    n_full = V // v_chunk
    if n_full > 0:
        def body(c, carry):
            accumulate(pl.multiple_of(c * v_chunk, v_chunk), v_chunk)
            return carry
        lax.fori_loop(0, n_full, body, 0)

    rem = V - n_full * v_chunk
    if rem:
        accumulate(n_full * v_chunk, rem)

    out_ref[...] = acc_ref[...].astype(out_ref.dtype)


def _vmem_gather(ids_flat, table, *, T, v_chunk, compute_dtype):
    N_pad = ids_flat.shape[0]
    V, D = table.shape
    grid = (N_pad // T,)
    vc = max(8, min(v_chunk, V))
    precision = None if compute_dtype == jnp.bfloat16 else lax.Precision.HIGHEST
    kernel = functools.partial(_vmem_table_kernel, v_chunk=vc,
                               compute_dtype=compute_dtype, precision=precision)

    itemsize = jnp.dtype(table.dtype).itemsize
    # Explicit VMEM budget: single-buffered table + double-buffered out tile +
    # f32 accumulator + one V-chunk of one-hot/iota temporaries + margin.
    est = (V * D * itemsize
           + 2 * T * D * itemsize
           + T * D * 4
           + 2 * T * vc * 4
           + vc * D * itemsize
           + (4 << 20))
    vmem_limit = int(min(64 << 20, max(16 << 20, est)))

    ids_col = ids_flat.reshape(N_pad, 1)

    def build(table_spec):
        return pl.pallas_call(
            kernel,
            out_shape=jax.ShapeDtypeStruct((N_pad, D), table.dtype),
            grid_spec=pltpu.PrefetchScalarGridSpec(
                num_scalar_prefetch=0,
                grid=grid,
                in_specs=[
                    pl.BlockSpec((T, 1), lambda i: (i, 0)),   # ids chunk
                    table_spec,                               # whole table, resident
                ],
                out_specs=pl.BlockSpec((T, D), lambda i: (i, 0)),
                scratch_shapes=[pltpu.VMEM((T, D), jnp.float32)],
            ),
            compiler_params=pltpu.CompilerParams(
                dimension_semantics=("parallel",),            # tokens independent
                vmem_limit_bytes=vmem_limit,
            ),
        )

    try:
        # Constant-index table block: single-buffer it (halves its VMEM cost).
        f = build(pl.BlockSpec((V, D), lambda i: (0, 0),
                               pipeline_mode=pl.Buffered(1)))
        return f(ids_col, table)
    except Exception:
        # Fallback: default (double-buffered) table block.
        f = build(pl.BlockSpec((V, D), lambda i: (0, 0)))
        return f(ids_col, table)


# ---------------------------------------------------------------------------
# Path B: large vocab — table in HBM, row-DMA gather through a semaphore ring.
# ---------------------------------------------------------------------------
def _dma_gather_kernel(ids_smem, table_hbm, out_ref, copy_sems, *, n_tokens, ring):
    # ids_smem:  (N_chunk,) int32 in SMEM (scalar prefetch)
    # table_hbm: (V, D) ref left in HBM (memory_space=pl.ANY)
    # out_ref:   (T, D) VMEM output tile for this grid step
    # copy_sems: (R,) DMA semaphore ring
    T = out_ref.shape[0]
    R = ring
    i = pl.program_id(0)
    base = i * T                                   # hoisted out of the loops
    n_valid = jnp.minimum(jnp.int32(T), jnp.int32(n_tokens) - base)

    def step(t, carry):
        @pl.when(t < n_valid)                      # skip padded tokens
        def _():
            slot = t % R

            @pl.when(t >= R)                       # recycle ring slot: wait copy t-R
            def _():
                pltpu.make_async_copy(
                    table_hbm.at[0], out_ref.at[t - R], copy_sems.at[slot]
                ).wait()

            tok = ids_smem[base + t]
            pltpu.make_async_copy(
                table_hbm.at[tok], out_ref.at[t], copy_sems.at[slot]
            ).start()
        return carry

    lax.fori_loop(0, T, step, 0, unroll=min(8, T))

    # Drain the last (up to R) outstanding copies — one per ring slot.
    for s in range(R):
        @pl.when(s < n_valid)
        def _(s=s):
            pltpu.make_async_copy(
                table_hbm.at[0], out_ref.at[s], copy_sems.at[s]
            ).wait()


def _dma_gather(ids_chunk, table, *, T, ring, n_valid):
    N_pad = ids_chunk.shape[0]
    V, D = table.shape
    grid = (N_pad // T,)
    R = max(1, min(ring, T))
    kernel = functools.partial(_dma_gather_kernel, n_tokens=n_valid, ring=R)
    return pl.pallas_call(
        kernel,
        out_shape=jax.ShapeDtypeStruct((N_pad, D), table.dtype),
        grid_spec=pltpu.PrefetchScalarGridSpec(
            num_scalar_prefetch=1,                          # ids -> SMEM
            grid=grid,
            in_specs=[pl.BlockSpec(memory_space=pl.ANY)],   # table stays in HBM
            out_specs=pl.BlockSpec((T, D), lambda i, ids: (i, 0)),
            scratch_shapes=[pltpu.SemaphoreType.DMA((R,))],
        ),
        compiler_params=pltpu.CompilerParams(
            dimension_semantics=("parallel",),
        ),
    )(ids_chunk, table)


# ---------------------------------------------------------------------------
# Wrapper: HostEmbedding.forward equivalent -> table[ids]
# ---------------------------------------------------------------------------
def host_embedding(ids, table, *,
                   block_tokens_vmem=256,
                   block_tokens_dma=512,
                   v_chunk=1024,
                   dma_ring=8,
                   vmem_table_limit_bytes=None,
                   max_tokens_per_dma_call=32768,
                   force_dma_gather=False,
                   gather_compute_dtype=None):
    """Pallas equivalent of HostEmbedding.forward: table[ids] -> (*ids.shape, D)."""
    orig_shape = ids.shape
    V, D = table.shape
    N = int(ids.size)
    itemsize = jnp.dtype(table.dtype).itemsize

    # Clamp ids (safety vs. OOB row DMAs / index math).
    # TODO(synk): torch.nn.Embedding raises on OOB ids; clamping is the safe in-kernel stand-in.
    ids_flat = jnp.clip(ids.reshape(-1).astype(jnp.int32), 0, V - 1)

    if vmem_table_limit_bytes is None:
        vmem_table_limit_bytes = _default_table_limit_bytes()
    table_bytes = V * D * itemsize
    use_vmem_table = (table_bytes <= vmem_table_limit_bytes) and not force_dma_gather

    # T tokens per grid step (multiple of 8 for sublane-dense (T, D) out tiles).
    block_tokens = block_tokens_vmem if use_vmem_table else block_tokens_dma
    T = _round_up(min(block_tokens, _round_up(max(N, 1), 8)), 8)
    N_pad = _round_up(max(N, 1), T)
    if N_pad > N:
        ids_flat = jnp.pad(ids_flat, (0, N_pad - N))        # pad with id 0

    if use_vmem_table:
        if gather_compute_dtype is None:
            compute_dtype = jnp.bfloat16 if table.dtype == jnp.bfloat16 else jnp.float32
        else:
            compute_dtype = gather_compute_dtype
        out = _vmem_gather(ids_flat, table, T=T, v_chunk=v_chunk,
                           compute_dtype=compute_dtype)
    else:
        # Chunk over calls so the scalar-prefetched ids stay small in SMEM
        # (1-D SMEM arrays pad to next_pow2(4*N) bytes).
        step = max(T, (max_tokens_per_dma_call // T) * T)
        parts = []
        for s in range(0, N_pad, step):
            e = min(N_pad, s + step)
            n_valid = max(0, min(N, e) - s)
            parts.append(_dma_gather(ids_flat[s:e], table,
                                     T=T, ring=dma_ring, n_valid=n_valid))
        out = parts[0] if len(parts) == 1 else jnp.concatenate(parts, axis=0)

    out = out[:N]
    return out.reshape(*orig_shape, D)


if __name__ == "__main__":
    # model_args.vocab_size = 256, model_args.dim = 128 (small demo shapes)
    VOCAB, DIM = 256, 128
    B, S = 2, 8

    key = jax.random.PRNGKey(0)
    k_emb, k_ids, k_ids2 = jax.random.split(key, 3)

    # torch.nn.Embedding default init: weight ~ N(0, 1)
    emb_f32 = jax.random.normal(k_emb, (VOCAB, DIM), dtype=jnp.float32)
    emb_bf16 = emb_f32.astype(jnp.bfloat16)
    ids = jax.random.randint(k_ids, (B, S), 0, VOCAB, dtype=jnp.int32)
    ids_ragged = jax.random.randint(k_ids2, (3, 5), 0, VOCAB, dtype=jnp.int32)

    # Path A: VMEM-resident table, chunked one-hot MXU gather (f32, HIGHEST precision).
    out_a = jax.block_until_ready(host_embedding(ids, emb_f32))
    ref_a = emb_f32[ids]
    assert out_a.shape == (B, S, DIM) and out_a.dtype == jnp.float32
    assert jnp.allclose(out_a, ref_a, atol=1e-6, rtol=0)

    # Path A with a bf16 table (bf16 one-hot -> native MXU path on v6e/v7x),
    # ragged token count to exercise padding.
    out_a16 = jax.block_until_ready(host_embedding(ids_ragged, emb_bf16))
    ref_a16 = emb_bf16[ids_ragged]
    assert out_a16.shape == (3, 5, DIM) and out_a16.dtype == jnp.bfloat16
    assert jnp.allclose(out_a16.astype(jnp.float32), ref_a16.astype(jnp.float32),
                        atol=1e-6, rtol=0)

    # Path B: HBM row-DMA gather with a semaphore ring (forced here to exercise it).
    out_b = jax.block_until_ready(host_embedding(ids, emb_f32, force_dma_gather=True))
    assert out_b.shape == (B, S, DIM) and out_b.dtype == jnp.float32
    assert jnp.array_equal(out_b, ref_a)

    # Path B with N not a multiple of the token tile -> padded-token DMA gating.
    out_b2 = jax.block_until_ready(host_embedding(ids_ragged, emb_f32,
                                                  force_dma_gather=True))
    assert jnp.array_equal(out_b2, emb_f32[ids_ragged])

    print("KERNEL_OK")
</pallas_src>

<mosaic_0001>
module attributes {stable_mosaic.version = 11 : i64} {
  func.func @_vmem_table_kernel(%arg0: i32, %arg1: memref<16x1xi32, #tpu.memory_space<vmem>>, %arg2: memref<256x128xf32, #tpu.memory_space<vmem>>, %arg3: memref<16x128xf32, #tpu.memory_space<vmem>>, %arg4: memref<16x128xf32, #tpu.memory_space<vmem>>) attributes {dimension_semantics = [#tpu.dimension_semantics<parallel>], iteration_bounds = array<i64: 1>, scalar_prefetch = 0 : i64, scratch_operands = 1 : i64, tpu.core_type = #tpu.core_type<tc>, window_params = [{transform_indices = @transform_0, window_bounds = array<i64: 16, 1>}, {pipeline_mode = #tpu.pipeline_mode<synchronous>, transform_indices = @transform_1, window_bounds = array<i64: 256, 128>}, {transform_indices = @transform_2, window_bounds = array<i64: 16, 128>}]} {
    %c0 = arith.constant 0 : index
    %c0_0 = arith.constant 0 : index
    %0 = vector.load %arg1[%c0, %c0_0] : memref<16x1xi32, #tpu.memory_space<vmem>>, vector<16x1xi32>
    %cst = arith.constant 0.000000e+00 : f32
    %1 = vector.broadcast %cst : f32 to vector<16x128xf32>
    %c0_1 = arith.constant 0 : index
    %c0_2 = arith.constant 0 : index
    %2 = vector.load %arg4[%c0_1, %c0_2] : memref<16x128xf32, #tpu.memory_space<vmem>>, vector<16x128xf32>
    tpu.vector_store %arg4[%c0_1, %c0_2], %1 {strides = array<i32>} : memref<16x128xf32, #tpu.memory_space<vmem>>, vector<16x128xf32>,
    %c0_i32 = arith.constant 0 : i32
    %c256_i32 = arith.constant 256 : i32
    %3 = arith.muli %c0_i32, %c256_i32 : i32
    %4 = tpu.assume_multiple %3, 256 : i32
    %5 = arith.index_cast %4 : i32 to index
    %c0_3 = arith.constant 0 : index
    %6 = vector.load %arg2[%5, %c0_3] : memref<256x128xf32, #tpu.memory_space<vmem>>, vector<256x128xf32>
    %7 = tpu.iota {dimensions = array<i32: 1>} : vector<16x256xi32>
    %8 = vector.broadcast %4 : i32 to vector<16x256xi32>
    %9 = arith.addi %7, %8 : vector<16x256xi32>
    %10 = vector.broadcast %0 : vector<16x1xi32> to vector<16x256xi32>
    %11 = arith.cmpi eq, %10, %9 : vector<16x256xi32>
    %12 = arith.extui %11 : vector<16x256xi1> to vector<16x256xi32>
    %13 = arith.sitofp %12 : vector<16x256xi32> to vector<16x256xf32>
    %c0_4 = arith.constant 0 : index
    %c0_5 = arith.constant 0 : index
    %14 = vector.load %arg4[%c0_4, %c0_5] : memref<16x128xf32, #tpu.memory_space<vmem>>, vector<16x128xf32>
    %cst_6 = arith.constant dense<0.000000e+00> : vector<16x128xf32>
    %15 = tpu.matmul %13, %6, %cst_6 {dimension_numbers = #tpu.dot_dimension_numbers<[1], [0], [0], [1], [0, 0, 1, 1], [], []>, precision = #tpu.contract_precision<fp32>} : vector<16x256xf32>, vector<256x128xf32>, vector<16x128xf32> -> vector<16x128xf32>
    %16 = arith.addf %14, %15 : vector<16x128xf32>
    %c0_7 = arith.constant 0 : index
    %c0_8 = arith.constant 0 : index
    %17 = vector.load %arg4[%c0_7, %c0_8] : memref<16x128xf32, #tpu.memory_space<vmem>>, vector<16x128xf32>
    tpu.vector_store %arg4[%c0_7, %c0_8], %16 {strides = array<i32>} : memref<16x128xf32, #tpu.memory_space<vmem>>, vector<16x128xf32>,
    %c1_i32 = arith.constant 1 : i32
    %c0_9 = arith.constant 0 : index
    %c0_10 = arith.constant 0 : index
    %18 = vector.load %arg4[%c0_9, %c0_10] : memref<16x128xf32, #tpu.memory_space<vmem>>, vector<16x128xf32>
    %c0_11 = arith.constant 0 : index
    %c0_12 = arith.constant 0 : index
    %19 = vector.load %arg3[%c0_11, %c0_12] : memref<16x128xf32, #tpu.memory_space<vmem>>, vector<16x128xf32>
    tpu.vector_store %arg3[%c0_11, %c0_12], %18 {strides = array<i32>} : memref<16x128xf32, #tpu.memory_space<vmem>>, vector<16x128xf32>,
    return
  }
  func.func @transform_0(%arg0: i32) -> (i32, i32) {
    %c0_i32 = arith.constant 0 : i32
    %c0_i32_0 = arith.constant 0 : i32
    return %arg0, %c0_i32 : i32, i32
  }
  func.func @transform_1(%arg0: i32) -> (i32, i32) {
    %c0_i32 = arith.constant 0 : i32
    %c0_i32_0 = arith.constant 0 : i32
    %c0_i32_1 = arith.constant 0 : i32
    return %c0_i32, %c0_i32_0 : i32, i32
  }
  func.func @transform_2(%arg0: i32) -> (i32, i32) {
    %c0_i32 = arith.constant 0 : i32
    %c0_i32_0 = arith.constant 0 : i32
    return %arg0, %c0_i32 : i32, i32
  }
}

module attributes {stable_mosaic.version = 11 : i64} {
  func.func @_vmem_table_kernel(%arg0: i32, %arg1: memref<16x1xi32, #tpu.memory_space<vmem>>, %arg2: memref<256x128xf32, #tpu.memory_space<vmem>>, %arg3: memref<16x128xf32, #tpu.memory_space<vmem>>, %arg4: memref<16x128xf32, #tpu.memory_space<vmem>>) attributes {dimension_semantics = [#tpu.dimension_semantics<parallel>], iteration_bounds = array<i64: 1>, scalar_prefetch = 0 : i64, scratch_operands = 1 : i64, tpu.core_type = #tpu.core_type<tc>, window_params = [{transform_indices = @transform_0, window_bounds = array<i64: 16, 1>}, {pipeline_mode = #tpu.pipeline_mode<synchronous>, transform_indices = @transform_1, window_bounds = array<i64: 256, 128>}, {transform_indices = @transform_2, window_bounds = array<i64: 16, 128>}]} {
    %c0 = arith.constant 0 : index
    %c0_0 = arith.constant 0 : index
    %0 = vector.load %arg1[%c0, %c0_0] : memref<16x1xi32, #tpu.memory_space<vmem>>, vector<16x1xi32>
    %cst = arith.constant 0.000000e+00 : f32
    %1 = vector.broadcast %cst : f32 to vector<16x128xf32>
    %c0_1 = arith.constant 0 : index
    %c0_2 = arith.constant 0 : index
    %2 = vector.load %arg4[%c0_1, %c0_2] : memref<16x128xf32, #tpu.memory_space<vmem>>, vector<16x128xf32>
    tpu.vector_store %arg4[%c0_1, %c0_2], %1 {strides = array<i32>} : memref<16x128xf32, #tpu.memory_space<vmem>>, vector<16x128xf32>,
    %c0_i32 = arith.constant 0 : i32
    %c256_i32 = arith.constant 256 : i32
    %3 = arith.muli %c0_i32, %c256_i32 : i32
    %4 = tpu.assume_multiple %3, 256 : i32
    %5 = arith.index_cast %4 : i32 to index
    %c0_3 = arith.constant 0 : index
    %6 = vector.load %arg2[%5, %c0_3] : memref<256x128xf32, #tpu.memory_space<vmem>>, vector<256x128xf32>
    %7 = tpu.iota {dimensions = array<i32: 1>} : vector<16x256xi32>
    %8 = vector.broadcast %4 : i32 to vector<16x256xi32>
    %9 = arith.addi %7, %8 : vector<16x256xi32>
    %10 = vector.broadcast %0 : vector<16x1xi32> to vector<16x256xi32>
    %11 = arith.cmpi eq, %10, %9 : vector<16x256xi32>
    %12 = arith.extui %11 : vector<16x256xi1> to vector<16x256xi32>
    %13 = arith.sitofp %12 : vector<16x256xi32> to vector<16x256xf32>
    %c0_4 = arith.constant 0 : index
    %c0_5 = arith.constant 0 : index
    %14 = vector.load %arg4[%c0_4, %c0_5] : memref<16x128xf32, #tpu.memory_space<vmem>>, vector<16x128xf32>
    %cst_6 = arith.constant dense<0.000000e+00> : vector<16x128xf32>
    %15 = tpu.matmul %13, %6, %cst_6 {dimension_numbers = #tpu.dot_dimension_numbers<[1], [0], [0], [1], [0, 0, 1, 1], [], []>, precision = #tpu.contract_precision<fp32>} : vector<16x256xf32>, vector<256x128xf32>, vector<16x128xf32> -> vector<16x128xf32>
    %16 = arith.addf %14, %15 : vector<16x128xf32>
    %c0_7 = arith.constant 0 : index
    %c0_8 = arith.constant 0 : index
    %17 = vector.load %arg4[%c0_7, %c0_8] : memref<16x128xf32, #tpu.memory_space<vmem>>, vector<16x128xf32>
    tpu.vector_store %arg4[%c0_7, %c0_8], %16 {strides = array<i32>} : memref<16x128xf32, #tpu.memory_space<vmem>>, vector<16x128xf32>,
    %c1_i32 = arith.constant 1 : i32
    %c0_9 = arith.constant 0 : index
    %c0_10 = arith.constant 0 : index
    %18 = vector.load %arg4[%c0_9, %c0_10] : memref<16x128xf32, #tpu.memory_space<vmem>>, vector<16x128xf32>
    %c0_11 = arith.constant 0 : index
    %c0_12 = arith.constant 0 : index
    %19 = vector.load %arg3[%c0_11, %c0_12] : memref<16x128xf32, #tpu.memory_space<vmem>>, vector<16x128xf32>
    tpu.vector_store %arg3[%c0_11, %c0_12], %18 {strides = array<i32>} : memref<16x128xf32, #tpu.memory_space<vmem>>, vector<16x128xf32>,
    return
  }
  func.func @transform_0(%arg0: i32) -> (i32, i32) {
    %c0_i32 = arith.constant 0 : i32
    %c0_i32_0 = arith.constant 0 : i32
    return %arg0, %c0_i32 : i32, i32
  }
  func.func @transform_1(%arg0: i32) -> (i32, i32) {
    %c0_i32 = arith.constant 0 : i32
    %c0_i32_0 = arith.constant 0 : i32
    %c0_i32_1 = arith.constant 0 : i32
    return %c0_i32, %c0_i32_0 : i32, i32
  }
  func.func @transform_2(%arg0: i32) -> (i32, i32) {
    %c0_i32 = arith.constant 0 : i32
    %c0_i32_0 = arith.constant 0 : i32
    return %arg0, %c0_i32 : i32, i32
  }
}

</mosaic_0001>

<llo_original>
// kernel: tpu_custom_call.1
$region0: #{tpu_custom_call.1}
  #allocation0 [shape = 'u32[]', space=smem, size = 0x4, offset = 0x4, fixed_abs, tag = 'smem constant byte address 0x4 - core index']
  #allocation1 [shape = 'u32[144,128]{1,0:T(1,128)}', space=vmem, size = 0x12000, scoped, tag = 'internal scratch']
  #allocation2 [shape = 'f32[16,128]{1,0:T(8,128)}', space=vmem, size = 0x2000, scoped, tag = 'scratch operand']
  %s0 = inlined_call_operand.vmem [shape: s32[16,1], index: 0, kind: input, shape index: {}]
  %s1 = inlined_call_operand.hbm [shape: f32[256,128], index: 1, kind: input, shape index: {}]
  %s2 = inlined_call_operand.hbm [shape: f32[16,128], index: 2, kind: output, shape index: {}]
  %s3 = sld [smem:[#allocation0]]
  $region22: #{tpu_custom_call.1} parent=0
    _
  %s5 = ssub.s32 1, %s3
  %s6 = scalar_select 0, %s5, %s3
  $region1: #{tpu_custom_call.1} parent=0
    #allocation3 [shape = 'u8[131072]{0}', space=vmem, size = 0x20000, scoped, tag = 'input window, operand 1, single buffered']
    #allocation4 [shape = 's32[1]{0}', space=sflag, size = 0x4, scoped, tag = 'scoped memory for tpu_custom_call.1']
    #allocation5 [shape = 's32[1]{0}', space=sflag, size = 0x4, scoped, tag = 'scoped memory for tpu_custom_call.1']
    #allocation6 [shape = 'u8[8192]{0}', space=vmem, size = 0x2000, scoped, tag = 'output window, operand 0, single buffered']
    %7 = vsyncpa [#allocation4], 0
    %8 = vsyncpa [#allocation5], 0
    // Predicated region
    $region2: #{tpu_custom_call.1} parent=1 // pred_check
      _
    $region3: #{tpu_custom_call.1} parent=1 // pred_check_branch
      %10 = sbr.rel (0) target = $region5
    $region4: #{tpu_custom_call.1} parent=1 // pred_region
      _
    $region5: #{tpu_custom_call.1} parent=1 // pred_fallthru
      _
    // Predicated region
    $region6: #{tpu_custom_call.1} parent=1 // pred_check
      _
    $region7: #{tpu_custom_call.1} parent=1 // pred_check_branch
      %12 = sbr.rel (0) target = $region9
    $region8: #{tpu_custom_call.1} parent=1 // pred_region
      %s14 = ssub.s32 4096, 4096
      %15 = vsyncadd [#allocation4], %s14
      %s16 = sshll.u32 [#allocation3], 4
      %s17 = int_to_ptr.vmem [resolvable:$true] %s16
      %22 = dma.hbm_to_vmem [thread:$0]  %s1, 4096, %s17, [#allocation4], 128, 128, 8
    $region9: #{tpu_custom_call.1} parent=1 // pred_fallthru
      _
    // Predicated region
    $region10: #{tpu_custom_call.1} parent=1 // pred_check
      _
    $region11: #{tpu_custom_call.1} parent=1 // pred_check_branch
      %24 = sbr.rel (0) target = $region13
    $region12: #{tpu_custom_call.1} parent=1 // pred_region
      %25 = dma.done [#allocation4], 4096
    $region13: #{tpu_custom_call.1} parent=1 // pred_fallthru
      _
    %v26 = vld [vmem:[%s0] sm:$0xff]
    %v27 = vld [vmem:[%s0 + $0x8] sm:$0xff]
    %28 = vst [vmem:[#allocation2] sm:$0xff] 0.0
    %29 = vst [vmem:[#allocation2 + $0x8] sm:$0xff] 0.0
    %v30 = vld [vmem:[#allocation3] sm:$0xff]
    %v31 = vld [vmem:[#allocation3 + $0x8] sm:$0xff]
    %v32 = vld [vmem:[#allocation3 + $0x10] sm:$0xff]
    %v33 = vld [vmem:[#allocation3 + $0x18] sm:$0xff]
    %v34 = vld [vmem:[#allocation3 + $0x20] sm:$0xff]
    %v35 = vld [vmem:[#allocation3 + $0x28] sm:$0xff]
    %v36 = vld [vmem:[#allocation3 + $0x30] sm:$0xff]
    %v37 = vld [vmem:[#allocation3 + $0x38] sm:$0xff]
    %v38 = vld [vmem:[#allocation3 + $0x40] sm:$0xff]
    %v39 = vld [vmem:[#allocation3 + $0x48] sm:$0xff]
    %v40 = vld [vmem:[#allocation3 + $0x50] sm:$0xff]
    %v41 = vld [vmem:[#allocation3 + $0x58] sm:$0xff]
    %v42 = vld [vmem:[#allocation3 + $0x60] sm:$0xff]
    %v43 = vld [vmem:[#allocation3 + $0x68] sm:$0xff]
    %v44 = vld [vmem:[#allocation3 + $0x70] sm:$0xff]
    %v45 = vld [vmem:[#allocation3 + $0x78] sm:$0xff]
    %v46 = vld [vmem:[#allocation3 + $0x80] sm:$0xff]
    %v47 = vld [vmem:[#allocation3 + $0x88] sm:$0xff]
    %v48 = vld [vmem:[#allocation3 + $0x90] sm:$0xff]
    %v49 = vld [vmem:[#allocation3 + $0x98] sm:$0xff]
    %v50 = vld [vmem:[#allocation3 + $0xa0] sm:$0xff]
    %v51 = vld [vmem:[#allocation3 + $0xa8] sm:$0xff]
    %v52 = vld [vmem:[#allocation3 + $0xb0] sm:$0xff]
    %v53 = vld [vmem:[#allocation3 + $0xb8] sm:$0xff]
    %v54 = vld [vmem:[#allocation3 + $0xc0] sm:$0xff]
    %v55 = vld [vmem:[#allocation3 + $0xc8] sm:$0xff]
    %v56 = vld [vmem:[#allocation3 + $0xd0] sm:$0xff]
    %v57 = vld [vmem:[#allocation3 + $0xd8] sm:$0xff]
    %v58 = vld [vmem:[#allocation3 + $0xe0] sm:$0xff]
    %v59 = vld [vmem:[#allocation3 + $0xe8] sm:$0xff]
    %v60 = vld [vmem:[#allocation3 + $0xf0] sm:$0xff]
    %v61 = vld [vmem:[#allocation3 + $0xf8] sm:$0xff]
    %v62 = vlaneseq
    %v63 = vand.u32 %v62, 127
    %v64 = vadd.s32 %v63, 128
    %v65 = vstv 0
    %v66 = vadd.s32 %v63, %v65
    %v67 = vadd.s32 %v64, %v65
    %68 = vset.pattern.permute.xlu0 0
    %69 = vperm.xlu0 %68, %v26
    %v70 = vpop.permute.xlu0 %69
    %71 = vset.pattern.permute.xlu0 0
    %72 = vperm.xlu0 %71, %v27
    %v73 = vpop.permute.xlu0 %72
    %vm74 = vcmp.eq.s32.totalorder %v70, %v66
    %vm75 = vcmp.eq.s32.totalorder %v70, %v67
    %vm76 = vcmp.eq.s32.totalorder %v73, %v66
    %vm77 = vcmp.eq.s32.totalorder %v73, %v67
    %v78 = vsel %vm74, 1, 0
    %v79 = vsel %vm75, 1, 0
    %v80 = vsel %vm76, 1, 0
    %v81 = vsel %vm77, 1, 0
    %v82 = vcvt.s32.f32 %v78
    %v83 = vcvt.s32.f32 %v79
    %v84 = vcvt.s32.f32 %v80
    %v85 = vcvt.s32.f32 %v81
    %v86 = vld [vmem:[#allocation2] sm:$0xff]
    %v87 = vld [vmem:[#allocation2 + $0x8] sm:$0xff]
    %88 = vmatprep.subr.mxu0 0.0
    %v89 = vand.u32 %v30, 4294901760
    %90 = vmatpush1.msra.mxu0 %v89
    %91 = vmatprep.subr.mxu0 0.0
    %v92 = vand.u32 %v31, 4294901760
    %93 = vmatpush1.msra.mxu0 %v92
    %94 = vmatprep.subr.mxu0 0.0
    %v95 = vand.u32 %v32, 4294901760
    %96 = vmatpush1.msra.mxu0 %v95
    %97 = vmatprep.subr.mxu0 0.0
    %v98 = vand.u32 %v33, 4294901760
    %99 = vmatpush1.msra.mxu0 %v98
    %100 = vmatprep.subr.mxu0 0.0
    %v101 = vand.u32 %v34, 4294901760
    %102 = vmatpush1.msra.mxu0 %v101
    %103 = vmatprep.subr.mxu0 0.0
    %v104 = vand.u32 %v35, 4294901760
    %105 = vmatpush1.msra.mxu0 %v104
    %106 = vmatprep.subr.mxu0 0.0
    %v107 = vand.u32 %v36, 4294901760
    %108 = vmatpush1.msra.mxu0 %v107
    %109 = vmatprep.subr.mxu0 0.0
    %v110 = vand.u32 %v37, 4294901760
    %111 = vmatpush1.msra.mxu0 %v110
    %112 = vmatprep.subr.mxu0 0.0
    %v113 = vand.u32 %v38, 4294901760
    %114 = vmatpush1.msra.mxu0 %v113
    %115 = vmatprep.subr.mxu0 0.0
    %v116 = vand.u32 %v39, 4294901760
    %117 = vmatpush1.msra.mxu0 %v116
    %118 = vmatprep.subr.mxu0 0.0
    %v119 = vand.u32 %v40, 4294901760
    %120 = vmatpush1.msra.mxu0 %v119
    %121 = vmatprep.subr.mxu0 0.0
    %v122 = vand.u32 %v41, 4294901760
    %123 = vmatpush1.msra.mxu0 %v122
    %124 = vmatprep.subr.mxu0 0.0
    %v125 = vand.u32 %v42, 4294901760
    %126 = vmatpush1.msra.mxu0 %v125
    %127 = vmatprep.subr.mxu0 0.0
    %v128 = vand.u32 %v43, 4294901760
    %129 = vmatpush1.msra.mxu0 %v128
    %130 = vmatprep.subr.mxu0 0.0
    %v131 = vand.u32 %v44, 4294901760
    %132 = vmatpush1.msra.mxu0 %v131
    %133 = vmatprep.subr.mxu0 0.0
    %v134 = vand.u32 %v45, 4294901760
    %135 = vmatpush1.msra.mxu0 %v134
    %136 = vmatprep.subr.mxu0 0.0
    %v137 = vand.u32 %v46, 4294901760
    %138 = vmatpush1.msra.mxu0 %v137
    %139 = vmatprep.subr.mxu0 0.0
    %v140 = vand.u32 %v47, 4294901760
    %141 = vmatpush1.msra.mxu0 %v140
    %142 = vmatprep.subr.mxu0 0.0
    %v143 = vand.u32 %v48, 4294901760
    %144 = vmatpush1.msra.mxu0 %v143
    %145 = vmatprep.subr.mxu0 0.0
    %v146 = vand.u32 %v49, 4294901760
    %147 = vmatpush1.msra.mxu0 %v146
    %148 = vmatprep.subr.mxu0 0.0
    %v149 = vand.u32 %v50, 4294901760
    %150 = vmatpush1.msra.mxu0 %v149
    %151 = vmatprep.subr.mxu0 0.0
    %v152 = vand.u32 %v51, 4294901760
    %153 = vmatpush1.msra.mxu0 %v152
    %154 = vmatprep.subr.mxu0 0.0
    %v155 = vand.u32 %v52, 4294901760
    %156 = vmatpush1.msra.mxu0 %v155
    %157 = vmatprep.subr.mxu0 0.0
    %v158 = vand.u32 %v53, 4294901760
    %159 = vmatpush1.msra.mxu0 %v158
    %160 = vmatprep.subr.mxu0 0.0
    %v161 = vand.u32 %v54, 4294901760
    %162 = vmatpush1.msra.mxu0 %v161
    %163 = vmatprep.subr.mxu0 0.0
    %v164 = vand.u32 %v55, 4294901760
    %165 = vmatpush1.msra.mxu0 %v164
    %166 = vmatprep.subr.mxu0 0.0
    %v167 = vand.u32 %v56, 4294901760
    %168 = vmatpush1.msra.mxu0 %v167
    %169 = vmatprep.subr.mxu0 0.0
    %v170 = vand.u32 %v57, 4294901760
    %171 = vmatpush1.msra.mxu0 %v170
    %172 = vmatprep.subr.mxu0 0.0
    %v173 = vand.u32 %v58, 4294901760
    %174 = vmatpush1.msra.mxu0 %v173
    %175 = vmatprep.subr.mxu0 0.0
    %v176 = vand.u32 %v59, 4294901760
    %177 = vmatpush1.msra.mxu0 %v176
    %178 = vmatprep.subr.mxu0 0.0
    %v179 = vand.u32 %v60, 4294901760
    %180 = vmatpush1.msra.mxu0 %v179
    %181 = vmatprep.subr.mxu0 0.0
    %v182 = vand.u32 %v61, 4294901760
    %183 = vmatpush1.msra.mxu0 %v182
    %v184 = vand.u32 %v83, 4294901760
    %v185 = vsub.f32 %v83, %v184
    %v186 = vand.u32 %v185, 4294901760
    %v187 = vsub.f32 %v185, %v186
    %v188 = vand.u32 %v187, 4294901760
    %189 = vmatprep.mubr.f32.mxu0 %v188
    %v190 = vand.u32 %v82, 4294901760
    %v191 = vsub.f32 %v82, %v190
    %v192 = vand.u32 %v191, 4294901760
    %v193 = vsub.f32 %v191, %v192
    %v194 = vand.u32 %v193, 4294901760
    %195 = vmatmul.mubr.f32.gmra.mrb[0].mxu0 %v194
    %v196 = vpop.f32.mrb[0].mxu0
    %v197 = vadd.f32 0.0, %v196
    %v198 = vpop.f32.mrb[0].mxu0
    %v199 = vand.u32 %v85, 4294901760
    %v200 = vsub.f32 %v85, %v199
    %v201 = vand.u32 %v200, 4294901760
    %v202 = vsub.f32 %v200, %v201
    %v203 = vand.u32 %v202, 4294901760
    %204 = vmatprep.mubr.f32.mxu0 %v203
    %v205 = vand.u32 %v84, 4294901760
    %v206 = vsub.f32 %v84, %v205
    %v207 = vand.u32 %v206, 4294901760
    %v208 = vsub.f32 %v206, %v207
    %v209 = vand.u32 %v208, 4294901760
    %210 = vmatmul.mubr.f32.gmra.mrb[0].mxu0 %v209
    %v211 = vpop.f32.mrb[0].mxu0
    %v212 = vadd.f32 0.0, %v211
    %v213 = vpop.f32.mrb[0].mxu0
    %214 = vdwg.mxu0
    %215 = vmatprep.subr.mxu0 0.0
    %v216 = vand.u32 %v30, 4294901760
    %v217 = vsub.f32 %v30, %v216
    %v218 = vand.u32 %v217, 4294901760
    %v219 = vsub.f32 %v217, %v218
    %v220 = vand.u32 %v219, 4294901760
    %221 = vmatpush1.msra.mxu0 %v220
    %222 = vmatprep.subr.mxu0 0.0
    %v223 = vand.u32 %v31, 4294901760
    %v224 = vsub.f32 %v31, %v223
    %v225 = vand.u32 %v224, 4294901760
    %v226 = vsub.f32 %v224, %v225
    %v227 = vand.u32 %v226, 4294901760
    %228 = vmatpush1.msra.mxu0 %v227
    %229 = vmatprep.subr.mxu0 0.0
    %v230 = vand.u32 %v32, 4294901760
    %v231 = vsub.f32 %v32, %v230
    %v232 = vand.u32 %v231, 4294901760
    %v233 = vsub.f32 %v231, %v232
    %v234 = vand.u32 %v233, 4294901760
    %235 = vmatpush1.msra.mxu0 %v234
    %236 = vmatprep.subr.mxu0 0.0
    %v237 = vand.u32 %v33, 4294901760
    %v238 = vsub.f32 %v33, %v237
    %v239 = vand.u32 %v238, 4294901760
    %v240 = vsub.f32 %v238, %v239
    %v241 = vand.u32 %v240, 4294901760
    %242 = vmatpush1.msra.mxu0 %v241
    %243 = vmatprep.subr.mxu0 0.0
    %v244 = vand.u32 %v34, 4294901760
    %v245 = vsub.f32 %v34, %v244
    %v246 = vand.u32 %v245, 4294901760
    %v247 = vsub.f32 %v245, %v246
    %v248 = vand.u32 %v247, 4294901760
    %249 = vmatpush1.msra.mxu0 %v248
    %250 = vmatprep.subr.mxu0 0.0
    %v251 = vand.u32 %v35, 4294901760
    %v252 = vsub.f32 %v35, %v251
    %v253 = vand.u32 %v252, 4294901760
    %v254 = vsub.f32 %v252, %v253
    %v255 = vand.u32 %v254, 4294901760
    %256 = vmatpush1.msra.mxu0 %v255
    %257 = vmatprep.subr.mxu0 0.0
    %v258 = vand.u32 %v36, 4294901760
    %v259 = vsub.f32 %v36, %v258
    %v260 = vand.u32 %v259, 4294901760
    %v261 = vsub.f32 %v259, %v260
    %v262 = vand.u32 %v261, 4294901760
    %263 = vmatpush1.msra.mxu0 %v262
    %264 = vmatprep.subr.mxu0 0.0
    %v265 = vand.u32 %v37, 4294901760
    %v266 = vsub.f32 %v37, %v265
    %v267 = vand.u32 %v266, 4294901760
    %v268 = vsub.f32 %v266, %v267
    %v269 = vand.u32 %v268, 4294901760
    %270 = vmatpush1.msra.mxu0 %v269
    %271 = vmatprep.subr.mxu0 0.0
    %v272 = vand.u32 %v38, 4294901760
    %v273 = vsub.f32 %v38, %v272
    %v274 = vand.u32 %v273, 4294901760
    %v275 = vsub.f32 %v273, %v274
    %v276 = vand.u32 %v275, 4294901760
    %277 = vmatpush1.msra.mxu0 %v276
    %278 = vmatprep.subr.mxu0 0.0
    %v279 = vand.u32 %v39, 4294901760
    %v280 = vsub.f32 %v39, %v279
    %v281 = vand.u32 %v280, 4294901760
    %v282 = vsub.f32 %v280, %v281
    %v283 = vand.u32 %v282, 4294901760
    %284 = vmatpush1.msra.mxu0 %v283
    %285 = vmatprep.subr.mxu0 0.0
    %v286 = vand.u32 %v40, 4294901760
    %v287 = vsub.f32 %v40, %v286
    %v288 = vand.u32 %v287, 4294901760
    %v289 = vsub.f32 %v287, %v288
    %v290 = vand.u32 %v289, 4294901760
    %291 = vmatpush1.msra.mxu0 %v290
    %292 = vmatprep.subr.mxu0 0.0
    %v293 = vand.u32 %v41, 4294901760
    %v294 = vsub.f32 %v41, %v293
    %v295 = vand.u32 %v294, 4294901760
    %v296 = vsub.f32 %v294, %v295
    %v297 = vand.u32 %v296, 4294901760
    %298 = vmatpush1.msra.mxu0 %v297
    %299 = vmatprep.subr.mxu0 0.0
    %v300 = vand.u32 %v42, 4294901760
    %v301 = vsub.f32 %v42, %v300
    %v302 = vand.u32 %v301, 4294901760
    %v303 = vsub.f32 %v301, %v302
    %v304 = vand.u32 %v303, 4294901760
    %305 = vmatpush1.msra.mxu0 %v304
    %306 = vmatprep.subr.mxu0 0.0
    %v307 = vand.u32 %v43, 4294901760
    %v308 = vsub.f32 %v43, %v307
    %v309 = vand.u32 %v308, 4294901760
    %v310 = vsub.f32 %v308, %v309
    %v311 = vand.u32 %v310, 4294901760
    %312 = vmatpush1.msra.mxu0 %v311
    %313 = vmatprep.subr.mxu0 0.0
    %v314 = vand.u32 %v44, 4294901760
    %v315 = vsub.f32 %v44, %v314
    %v316 = vand.u32 %v315, 4294901760
    %v317 = vsub.f32 %v315, %v316
    %v318 = vand.u32 %v317, 4294901760
    %319 = vmatpush1.msra.mxu0 %v318
    %320 = vmatprep.subr.mxu0 0.0
    %v321 = vand.u32 %v45, 4294901760
    %v322 = vsub.f32 %v45, %v321
    %v323 = vand.u32 %v322, 4294901760
    %v324 = vsub.f32 %v322, %v323
    %v325 = vand.u32 %v324, 4294901760
    %326 = vmatpush1.msra.mxu0 %v325
    %327 = vmatprep.subr.mxu0 0.0
    %v328 = vand.u32 %v46, 4294901760
    %v329 = vsub.f32 %v46, %v328
    %v330 = vand.u32 %v329, 4294901760
    %v331 = vsub.f32 %v329, %v330
    %v332 = vand.u32 %v331, 4294901760
    %333 = vmatpush1.msra.mxu0 %v332
    %334 = vmatprep.subr.mxu0 0.0
    %v335 = vand.u32 %v47, 4294901760
    %v336 = vsub.f32 %v47, %v335
    %v337 = vand.u32 %v336, 4294901760
    %v338 = vsub.f32 %v336, %v337
    %v339 = vand.u32 %v338, 4294901760
    %340 = vmatpush1.msra.mxu0 %v339
    %341 = vmatprep.subr.mxu0 0.0
    %v342 = vand.u32 %v48, 4294901760
    %v343 = vsub.f32 %v48, %v342
    %v344 = vand.u32 %v343, 4294901760
    %v345 = vsub.f32 %v343, %v344
    %v346 = vand.u32 %v345, 4294901760
    %347 = vmatpush1.msra.mxu0 %v346
    %348 = vmatprep.subr.mxu0 0.0
    %v349 = vand.u32 %v49, 4294901760
    %v350 = vsub.f32 %v49, %v349
    %v351 = vand.u32 %v350, 4294901760
    %v352 = vsub.f32 %v350, %v351
    %v353 = vand.u32 %v352, 4294901760
    %354 = vmatpush1.msra.mxu0 %v353
    %355 = vmatprep.subr.mxu0 0.0
    %v356 = vand.u32 %v50, 4294901760
    %v357 = vsub.f32 %v50, %v356
    %v358 = vand.u32 %v357, 4294901760
    %v359 = vsub.f32 %v357, %v358
    %v360 = vand.u32 %v359, 4294901760
    %361 = vmatpush1.msra.mxu0 %v360
    %362 = vmatprep.subr.mxu0 0.0
    %v363 = vand.u32 %v51, 4294901760
    %v364 = vsub.f32 %v51, %v363
    %v365 = vand.u32 %v364, 4294901760
    %v366 = vsub.f32 %v364, %v365
    %v367 = vand.u32 %v366, 4294901760
    %368 = vmatpush1.msra.mxu0 %v367
    %369 = vmatprep.subr.mxu0 0.0
    %v370 = vand.u32 %v52, 4294901760
    %v371 = vsub.f32 %v52, %v370
    %v372 = vand.u32 %v371, 4294901760
    %v373 = vsub.f32 %v371, %v372
    %v374 = vand.u32 %v373, 4294901760
    %375 = vmatpush1.msra.mxu0 %v374
    %376 = vmatprep.subr.mxu0 0.0
    %v377 = vand.u32 %v53, 4294901760
    %v378 = vsub.f32 %v53, %v377
    %v379 = vand.u32 %v378, 4294901760
    %v380 = vsub.f32 %v378, %v379
    %v381 = vand.u32 %v380, 4294901760
    %382 = vmatpush1.msra.mxu0 %v381
    %383 = vmatprep.subr.mxu0 0.0
    %v384 = vand.u32 %v54, 4294901760
    %v385 = vsub.f32 %v54, %v384
    %v386 = vand.u32 %v385, 4294901760
    %v387 = vsub.f32 %v385, %v386
    %v388 = vand.u32 %v387, 4294901760
    %389 = vmatpush1.msra.mxu0 %v388
    %390 = vmatprep.subr.mxu0 0.0
    %v391 = vand.u32 %v55, 4294901760
    %v392 = vsub.f32 %v55, %v391
    %v393 = vand.u32 %v392, 4294901760
    %v394 = vsub.f32 %v392, %v393
    %v395 = vand.u32 %v394, 4294901760
    %396 = vmatpush1.msra.mxu0 %v395
    %397 = vmatprep.subr.mxu0 0.0
    %v398 = vand.u32 %v56, 4294901760
    %v399 = vsub.f32 %v56, %v398
    %v400 = vand.u32 %v399, 4294901760
    %v401 = vsub.f32 %v399, %v400
    %v402 = vand.u32 %v401, 4294901760
    %403 = vmatpush1.msra.mxu0 %v402
    %404 = vmatprep.subr.mxu0 0.0
    %v405 = vand.u32 %v57, 4294901760
    %v406 = vsub.f32 %v57, %v405
    %v407 = vand.u32 %v406, 4294901760
    %v408 = vsub.f32 %v406, %v407
    %v409 = vand.u32 %v408, 4294901760
    %410 = vmatpush1.msra.mxu0 %v409
    %411 = vmatprep.subr.mxu0 0.0
    %v412 = vand.u32 %v58, 4294901760
    %v413 = vsub.f32 %v58, %v412
    %v414 = vand.u32 %v413, 4294901760
    %v415 = vsub.f32 %v413, %v414
    %v416 = vand.u32 %v415, 4294901760
    %417 = vmatpush1.msra.mxu0 %v416
    %418 = vmatprep.subr.mxu0 0.0
    %v419 = vand.u32 %v59, 4294901760
    %v420 = vsub.f32 %v59, %v419
    %v421 = vand.u32 %v420, 4294901760
    %v422 = vsub.f32 %v420, %v421
    %v423 = vand.u32 %v422, 4294901760
    %424 = vmatpush1.msra.mxu0 %v423
    %425 = vmatprep.subr.mxu0 0.0
    %v426 = vand.u32 %v60, 4294901760
    %v427 = vsub.f32 %v60, %v426
    %v428 = vand.u32 %v427, 4294901760
    %v429 = vsub.f32 %v427, %v428
    %v430 = vand.u32 %v429, 4294901760
    %431 = vmatpush1.msra.mxu0 %v430
    %432 = vmatprep.subr.mxu0 0.0
    %v433 = vand.u32 %v61, 4294901760
    %v434 = vsub.f32 %v61, %v433
    %v435 = vand.u32 %v434, 4294901760
    %v436 = vsub.f32 %v434, %v435
    %v437 = vand.u32 %v436, 4294901760
    %438 = vmatpush1.msra.mxu0 %v437
    %v439 = vand.u32 %v83, 4294901760
    %440 = vmatprep.mubr.f32.mxu0 %v439
    %v441 = vand.u32 %v82, 4294901760
    %442 = vmatmul.mubr.f32.gmra.mrb[0].mxu0 %v441
    %v443 = vpop.f32.mrb[0].mxu0
    %v444 = vadd.f32 %v197, %v443
    %v445 = vpop.f32.mrb[0].mxu0
    %v446 = vand.u32 %v85, 4294901760
    %447 = vmatprep.mubr.f32.mxu0 %v446
    %v448 = vand.u32 %v84, 4294901760
    %449 = vmatmul.mubr.f32.gmra.mrb[0].mxu0 %v448
    %v450 = vpop.f32.mrb[0].mxu0
    %v451 = vadd.f32 %v212, %v450
    %v452 = vpop.f32.mrb[0].mxu0
    %453 = vdwg.mxu0
    %454 = vmatprep.subr.mxu0 0.0
    %v455 = vand.u32 %v30, 4294901760
    %v456 = vsub.f32 %v30, %v455
    %457 = vmatpush1.msra.mxu0 %v456
    %458 = vmatprep.subr.mxu0 0.0
    %v459 = vand.u32 %v31, 4294901760
    %v460 = vsub.f32 %v31, %v459
    %461 = vmatpush1.msra.mxu0 %v460
    %462 = vmatprep.subr.mxu0 0.0
    %v463 = vand.u32 %v32, 4294901760
    %v464 = vsub.f32 %v32, %v463
    %465 = vmatpush1.msra.mxu0 %v464
    %466 = vmatprep.subr.mxu0 0.0
    %v467 = vand.u32 %v33, 4294901760
    %v468 = vsub.f32 %v33, %v467
    %469 = vmatpush1.msra.mxu0 %v468
    %470 = vmatprep.subr.mxu0 0.0
    %v471 = vand.u32 %v34, 4294901760
    %v472 = vsub.f32 %v34, %v471
    %473 = vmatpush1.msra.mxu0 %v472
    %474 = vmatprep.subr.mxu0 0.0
    %v475 = vand.u32 %v35, 4294901760
    %v476 = vsub.f32 %v35, %v475
    %477 = vmatpush1.msra.mxu0 %v476
    %478 = vmatprep.subr.mxu0 0.0
    %v479 = vand.u32 %v36, 4294901760
    %v480 = vsub.f32 %v36, %v479
    %481 = vmatpush1.msra.mxu0 %v480
    %482 = vmatprep.subr.mxu0 0.0
    %v483 = vand.u32 %v37, 4294901760
    %v484 = vsub.f32 %v37, %v483
    %485 = vmatpush1.msra.mxu0 %v484
    %486 = vmatprep.subr.mxu0 0.0
    %v487 = vand.u32 %v38, 4294901760
    %v488 = vsub.f32 %v38, %v487
    %489 = vmatpush1.msra.mxu0 %v488
    %490 = vmatprep.subr.mxu0 0.0
    %v491 = vand.u32 %v39, 4294901760
    %v492 = vsub.f32 %v39, %v491
    %493 = vmatpush1.msra.mxu0 %v492
    %494 = vmatprep.subr.mxu0 0.0
    %v495 = vand.u32 %v40, 4294901760
    %v496 = vsub.f32 %v40, %v495
    %497 = vmatpush1.msra.mxu0 %v496
    %498 = vmatprep.subr.mxu0 0.0
    %v499 = vand.u32 %v41, 4294901760
    %v500 = vsub.f32 %v41, %v499
    %501 = vmatpush1.msra.mxu0 %v500
    %502 = vmatprep.subr.mxu0 0.0
    %v503 = vand.u32 %v42, 4294901760
    %v504 = vsub.f32 %v42, %v503
    %505 = vmatpush1.msra.mxu0 %v504
    %506 = vmatprep.subr.mxu0 0.0
    %v507 = vand.u32 %v43, 4294901760
    %v508 = vsub.f32 %v43, %v507
    %509 = vmatpush1.msra.mxu0 %v508
    %510 = vmatprep.subr.mxu0 0.0
    %v511 = vand.u32 %v44, 4294901760
    %v512 = vsub.f32 %v44, %v511
    %513 = vmatpush1.msra.mxu0 %v512
    %514 = vmatprep.subr.mxu0 0.0
    %v515 = vand.u32 %v45, 4294901760
    %v516 = vsub.f32 %v45, %v515
    %517 = vmatpush1.msra.mxu0 %v516
    %518 = vmatprep.subr.mxu0 0.0
    %v519 = vand.u32 %v46, 4294901760
    %v520 = vsub.f32 %v46, %v519
    %521 = vmatpush1.msra.mxu0 %v520
    %522 = vmatprep.subr.mxu0 0.0
    %v523 = vand.u32 %v47, 4294901760
    %v524 = vsub.f32 %v47, %v523
    %525 = vmatpush1.msra.mxu0 %v524
    %526 = vmatprep.subr.mxu0 0.0
    %v527 = vand.u32 %v48, 4294901760
    %v528 = vsub.f32 %v48, %v527
    %529 = vmatpush1.msra.mxu0 %v528
    %530 = vmatprep.subr.mxu0 0.0
    %v531 = vand.u32 %v49, 4294901760
    %v532 = vsub.f32 %v49, %v531
    %533 = vmatpush1.msra.mxu0 %v532
    %534 = vmatprep.subr.mxu0 0.0
    %v535 = vand.u32 %v50, 4294901760
    %v536 = vsub.f32 %v50, %v535
    %537 = vmatpush1.msra.mxu0 %v536
    %538 = vmatprep.subr.mxu0 0.0
    %v539 = vand.u32 %v51, 4294901760
    %v540 = vsub.f32 %v51, %v539
    %541 = vmatpush1.msra.mxu0 %v540
    %542 = vmatprep.subr.mxu0 0.0
    %v543 = vand.u32 %v52, 4294901760
    %v544 = vsub.f32 %v52, %v543
    %545 = vmatpush1.msra.mxu0 %v544
    %546 = vmatprep.subr.mxu0 0.0
    %v547 = vand.u32 %v53, 4294901760
    %v548 = vsub.f32 %v53, %v547
    %549 = vmatpush1.msra.mxu0 %v548
    %550 = vmatprep.subr.mxu0 0.0
    %v551 = vand.u32 %v54, 4294901760
    %v552 = vsub.f32 %v54, %v551
    %553 = vmatpush1.msra.mxu0 %v552
    %554 = vmatprep.subr.mxu0 0.0
    %v555 = vand.u32 %v55, 4294901760
    %v556 = vsub.f32 %v55, %v555
    %557 = vmatpush1.msra.mxu0 %v556
    %558 = vmatprep.subr.mxu0 0.0
    %v559 = vand.u32 %v56, 4294901760
    %v560 = vsub.f32 %v56, %v559
    %561 = vmatpush1.msra.mxu0 %v560
    %562 = vmatprep.subr.mxu0 0.0
    %v563 = vand.u32 %v57, 4294901760
    %v564 = vsub.f32 %v57, %v563
    %565 = vmatpush1.msra.mxu0 %v564
    %566 = vmatprep.subr.mxu0 0.0
    %v567 = vand.u32 %v58, 4294901760
    %v568 = vsub.f32 %v58, %v567
    %569 = vmatpush1.msra.mxu0 %v568
    %570 = vmatprep.subr.mxu0 0.0
    %v571 = vand.u32 %v59, 4294901760
    %v572 = vsub.f32 %v59, %v571
    %573 = vmatpush1.msra.mxu0 %v572
    %574 = vmatprep.subr.mxu0 0.0
    %v575 = vand.u32 %v60, 4294901760
    %v576 = vsub.f32 %v60, %v575
    %577 = vmatpush1.msra.mxu0 %v576
    %578 = vmatprep.subr.mxu0 0.0
    %v579 = vand.u32 %v61, 4294901760
    %v580 = vsub.f32 %v61, %v579
    %581 = vmatpush1.msra.mxu0 %v580
    %v582 = vand.u32 %v83, 4294901760
    %v583 = vsub.f32 %v83, %v582
    %584 = vmatprep.mubr.f32.mxu0 %v583
    %v585 = vand.u32 %v82, 4294901760
    %v586 = vsub.f32 %v82, %v585
    %587 = vmatmul.mubr.f32.gmra.mrb[0].mxu0 %v586
    %v588 = vpop.f32.mrb[0].mxu0
    %v589 = vadd.f32 %v444, %v588
    %v590 = vpop.f32.mrb[0].mxu0
    %v591 = vand.u32 %v85, 4294901760
    %v592 = vsub.f32 %v85, %v591
    %593 = vmatprep.mubr.f32.mxu0 %v592
    %v594 = vand.u32 %v84, 4294901760
    %v595 = vsub.f32 %v84, %v594
    %596 = vmatmul.mubr.f32.gmra.mrb[0].mxu0 %v595
    %v597 = vpop.f32.mrb[0].mxu0
    %v598 = vadd.f32 %v451, %v597
    %v599 = vpop.f32.mrb[0].mxu0
    %600 = vdwg.mxu0
    %601 = vmatprep.subr.mxu0 0.0
    %v602 = vand.u32 %v30, 4294901760
    %603 = vmatpush1.msra.mxu0 %v602
    %604 = vmatprep.subr.mxu0 0.0
    %v605 = vand.u32 %v31, 4294901760
    %606 = vmatpush1.msra.mxu0 %v605
    %607 = vmatprep.subr.mxu0 0.0
    %v608 = vand.u32 %v32, 4294901760
    %609 = vmatpush1.msra.mxu0 %v608
    %610 = vmatprep.subr.mxu0 0.0
    %v611 = vand.u32 %v33, 4294901760
    %612 = vmatpush1.msra.mxu0 %v611
    %613 = vmatprep.subr.mxu0 0.0
    %v614 = vand.u32 %v34, 4294901760
    %615 = vmatpush1.msra.mxu0 %v614
    %616 = vmatprep.subr.mxu0 0.0
    %v617 = vand.u32 %v35, 4294901760
    %618 = vmatpush1.msra.mxu0 %v617
    %619 = vmatprep.subr.mxu0 0.0
    %v620 = vand.u32 %v36, 4294901760
    %621 = vmatpush1.msra.mxu0 %v620
    %622 = vmatprep.subr.mxu0 0.0
    %v623 = vand.u32 %v37, 4294901760
    %624 = vmatpush1.msra.mxu0 %v623
    %625 = vmatprep.subr.mxu0 0.0
    %v626 = vand.u32 %v38, 4294901760
    %627 = vmatpush1.msra.mxu0 %v626
    %628 = vmatprep.subr.mxu0 0.0
    %v629 = vand.u32 %v39, 4294901760
    %630 = vmatpush1.msra.mxu0 %v629
    %631 = vmatprep.subr.mxu0 0.0
    %v632 = vand.u32 %v40, 4294901760
    %633 = vmatpush1.msra.mxu0 %v632
    %634 = vmatprep.subr.mxu0 0.0
    %v635 = vand.u32 %v41, 4294901760
    %636 = vmatpush1.msra.mxu0 %v635
    %637 = vmatprep.subr.mxu0 0.0
    %v638 = vand.u32 %v42, 4294901760
    %639 = vmatpush1.msra.mxu0 %v638
    %640 = vmatprep.subr.mxu0 0.0
    %v641 = vand.u32 %v43, 4294901760
    %642 = vmatpush1.msra.mxu0 %v641
    %643 = vmatprep.subr.mxu0 0.0
    %v644 = vand.u32 %v44, 4294901760
    %645 = vmatpush1.msra.mxu0 %v644
    %646 = vmatprep.subr.mxu0 0.0
    %v647 = vand.u32 %v45, 4294901760
    %648 = vmatpush1.msra.mxu0 %v647
    %649 = vmatprep.subr.mxu0 0.0
    %v650 = vand.u32 %v46, 4294901760
    %651 = vmatpush1.msra.mxu0 %v650
    %652 = vmatprep.subr.mxu0 0.0
    %v653 = vand.u32 %v47, 4294901760
    %654 = vmatpush1.msra.mxu0 %v653
    %655 = vmatprep.subr.mxu0 0.0
    %v656 = vand.u32 %v48, 4294901760
    %657 = vmatpush1.msra.mxu0 %v656
    %658 = vmatprep.subr.mxu0 0.0
    %v659 = vand.u32 %v49, 4294901760
    %660 = vmatpush1.msra.mxu0 %v659
    %661 = vmatprep.subr.mxu0 0.0
    %v662 = vand.u32 %v50, 4294901760
    %663 = vmatpush1.msra.mxu0 %v662
    %664 = vmatprep.subr.mxu0 0.0
    %v665 = vand.u32 %v51, 4294901760
    %666 = vmatpush1.msra.mxu0 %v665
    %667 = vmatprep.subr.mxu0 0.0
    %v668 = vand.u32 %v52, 4294901760
    %669 = vmatpush1.msra.mxu0 %v668
    %670 = vmatprep.subr.mxu0 0.0
    %v671 = vand.u32 %v53, 4294901760
    %672 = vmatpush1.msra.mxu0 %v671
    %673 = vmatprep.subr.mxu0 0.0
    %v674 = vand.u32 %v54, 4294901760
    %675 = vmatpush1.msra.mxu0 %v674
    %676 = vmatprep.subr.mxu0 0.0
    %v677 = vand.u32 %v55, 4294901760
    %678 = vmatpush1.msra.mxu0 %v677
    %679 = vmatprep.subr.mxu0 0.0
    %v680 = vand.u32 %v56, 4294901760
    %681 = vmatpush1.msra.mxu0 %v680
    %682 = vmatprep.subr.mxu0 0.0
    %v683 = vand.u32 %v57, 4294901760
    %684 = vmatpush1.msra.mxu0 %v683
    %685 = vmatprep.subr.mxu0 0.0
    %v686 = vand.u32 %v58, 4294901760
    %687 = vmatpush1.msra.mxu0 %v686
    %688 = vmatprep.subr.mxu0 0.0
    %v689 = vand.u32 %v59, 4294901760
    %690 = vmatpush1.msra.mxu0 %v689
    %691 = vmatprep.subr.mxu0 0.0
    %v692 = vand.u32 %v60, 4294901760
    %693 = vmatpush1.msra.mxu0 %v692
    %694 = vmatprep.subr.mxu0 0.0
    %v695 = vand.u32 %v61, 4294901760
    %696 = vmatpush1.msra.mxu0 %v695
    %v697 = vand.u32 %v83, 4294901760
    %v698 = vsub.f32 %v83, %v697
    %v699 = vand.u32 %v698, 4294901760
    %700 = vmatprep.mubr.f32.mxu0 %v699
    %v701 = vand.u32 %v82, 4294901760
    %v702 = vsub.f32 %v82, %v701
    %v703 = vand.u32 %v702, 4294901760
    %704 = vmatmul.mubr.f32.gmra.mrb[0].mxu0 %v703
    %v705 = vpop.f32.mrb[0].mxu0
    %v706 = vadd.f32 %v589, %v705
    %v707 = vpop.f32.mrb[0].mxu0
    %v708 = vand.u32 %v85, 4294901760
    %v709 = vsub.f32 %v85, %v708
    %v710 = vand.u32 %v709, 4294901760
    %711 = vmatprep.mubr.f32.mxu0 %v710
    %v712 = vand.u32 %v84, 4294901760
    %v713 = vsub.f32 %v84, %v712
    %v714 = vand.u32 %v713, 4294901760
    %715 = vmatmul.mubr.f32.gmra.mrb[0].mxu0 %v714
    %v716 = vpop.f32.mrb[0].mxu0
    %v717 = vadd.f32 %v598, %v716
    %v718 = vpop.f32.mrb[0].mxu0
    %719 = vdwg.mxu0
    %720 = vmatprep.subr.mxu0 0.0
    %v721 = vand.u32 %v30, 4294901760
    %v722 = vsub.f32 %v30, %v721
    %v723 = vand.u32 %v722, 4294901760
    %724 = vmatpush1.msra.mxu0 %v723
    %725 = vmatprep.subr.mxu0 0.0
    %v726 = vand.u32 %v31, 4294901760
    %v727 = vsub.f32 %v31, %v726
    %v728 = vand.u32 %v727, 4294901760
    %729 = vmatpush1.msra.mxu0 %v728
    %730 = vmatprep.subr.mxu0 0.0
    %v731 = vand.u32 %v32, 4294901760
    %v732 = vsub.f32 %v32, %v731
    %v733 = vand.u32 %v732, 4294901760
    %734 = vmatpush1.msra.mxu0 %v733
    %735 = vmatprep.subr.mxu0 0.0
    %v736 = vand.u32 %v33, 4294901760
    %v737 = vsub.f32 %v33, %v736
    %v738 = vand.u32 %v737, 4294901760
    %739 = vmatpush1.msra.mxu0 %v738
    %740 = vmatprep.subr.mxu0 0.0
    %v741 = vand.u32 %v34, 4294901760
    %v742 = vsub.f32 %v34, %v741
    %v743 = vand.u32 %v742, 4294901760
    %744 = vmatpush1.msra.mxu0 %v743
    %745 = vmatprep.subr.mxu0 0.0
    %v746 = vand.u32 %v35, 4294901760
    %v747 = vsub.f32 %v35, %v746
    %v748 = vand.u32 %v747, 4294901760
    %749 = vmatpush1.msra.mxu0 %v748
    %750 = vmatprep.subr.mxu0 0.0
    %v751 = vand.u32 %v36, 4294901760
    %v752 = vsub.f32 %v36, %v751
    %v753 = vand.u32 %v752, 4294901760
    %754 = vmatpush1.msra.mxu0 %v753
    %755 = vmatprep.subr.mxu0 0.0
    %v756 = vand.u32 %v37, 4294901760
    %v757 = vsub.f32 %v37, %v756
    %v758 = vand.u32 %v757, 4294901760
    %759 = vmatpush1.msra.mxu0 %v758
    %760 = vmatprep.subr.mxu0 0.0
    %v761 = vand.u32 %v38, 4294901760
    %v762 = vsub.f32 %v38, %v761
    %v763 = vand.u32 %v762, 4294901760
    %764 = vmatpush1.msra.mxu0 %v763
    %765 = vmatprep.subr.mxu0 0.0
    %v766 = vand.u32 %v39, 4294901760
    %v767 = vsub.f32 %v39, %v766
    %v768 = vand.u32 %v767, 4294901760
    %769 = vmatpush1.msra.mxu0 %v768
    %770 = vmatprep.subr.mxu0 0.0
    %v771 = vand.u32 %v40, 4294901760
    %v772 = vsub.f32 %v40, %v771
    %v773 = vand.u32 %v772, 4294901760
    %774 = vmatpush1.msra.mxu0 %v773
    %775 = vmatprep.subr.mxu0 0.0
    %v776 = vand.u32 %v41, 4294901760
    %v777 = vsub.f32 %v41, %v776
    %v778 = vand.u32 %v777, 4294901760
    %779 = vmatpush1.msra.mxu0 %v778
    %780 = vmatprep.subr.mxu0 0.0
    %v781 = vand.u32 %v42, 4294901760
    %v782 = vsub.f32 %v42, %v781
    %v783 = vand.u32 %v782, 4294901760
    %784 = vmatpush1.msra.mxu0 %v783
    %785 = vmatprep.subr.mxu0 0.0
    %v786 = vand.u32 %v43, 4294901760
    %v787 = vsub.f32 %v43, %v786
    %v788 = vand.u32 %v787, 4294901760
    %789 = vmatpush1.msra.mxu0 %v788
    %790 = vmatprep.subr.mxu0 0.0
    %v791 = vand.u32 %v44, 4294901760
    %v792 = vsub.f32 %v44, %v791
    %v793 = vand.u32 %v792, 4294901760
    %794 = vmatpush1.msra.mxu0 %v793
    %795 = vmatprep.subr.mxu0 0.0
    %v796 = vand.u32 %v45, 4294901760
    %v797 = vsub.f32 %v45, %v796
    %v798 = vand.u32 %v797, 4294901760
    %799 = vmatpush1.msra.mxu0 %v798
    %800 = vmatprep.subr.mxu0 0.0
    %v801 = vand.u32 %v46, 4294901760
    %v802 = vsub.f32 %v46, %v801
    %v803 = vand.u32 %v802, 4294901760
    %804 = vmatpush1.msra.mxu0 %v803
    %805 = vmatprep.subr.mxu0 0.0
    %v806 = vand.u32 %v47, 4294901760
    %v807 = vsub.f32 %v47, %v806
    %v808 = vand.u32 %v807, 4294901760
    %809 = vmatpush1.msra.mxu0 %v808
    %810 = vmatprep.subr.mxu0 0.0
    %v811 = vand.u32 %v48, 4294901760
    %v812 = vsub.f32 %v48, %v811
    %v813 = vand.u32 %v812, 4294901760
    %814 = vmatpush1.msra.mxu0 %v813
    %815 = vmatprep.subr.mxu0 0.0
    %v816 = vand.u32 %v49, 4294901760
    %v817 = vsub.f32 %v49, %v816
    %v818 = vand.u32 %v817, 4294901760
    %819 = vmatpush1.msra.mxu0 %v818
    %820 = vmatprep.subr.mxu0 0.0
    %v821 = vand.u32 %v50, 4294901760
    %v822 = vsub.f32 %v50, %v821
    %v823 = vand.u32 %v822, 4294901760
    %824 = vmatpush1.msra.mxu0 %v823
    %825 = vmatprep.subr.mxu0 0.0
    %v826 = vand.u32 %v51, 4294901760
    %v827 = vsub.f32 %v51, %v826
    %v828 = vand.u32 %v827, 4294901760
    %829 = vmatpush1.msra.mxu0 %v828
    %830 = vmatprep.subr.mxu0 0.0
    %v831 = vand.u32 %v52, 4294901760
    %v832 = vsub.f32 %v52, %v831
    %v833 = vand.u32 %v832, 4294901760
    %834 = vmatpush1.msra.mxu0 %v833
    %835 = vmatprep.subr.mxu0 0.0
    %v836 = vand.u32 %v53, 4294901760
    %v837 = vsub.f32 %v53, %v836
    %v838 = vand.u32 %v837, 4294901760
    %839 = vmatpush1.msra.mxu0 %v838
    %840 = vmatprep.subr.mxu0 0.0
    %v841 = vand.u32 %v54, 4294901760
    %v842 = vsub.f32 %v54, %v841
    %v843 = vand.u32 %v842, 4294901760
    %844 = vmatpush1.msra.mxu0 %v843
    %845 = vmatprep.subr.mxu0 0.0
    %v846 = vand.u32 %v55, 4294901760
    %v847 = vsub.f32 %v55, %v846
    %v848 = vand.u32 %v847, 4294901760
    %849 = vmatpush1.msra.mxu0 %v848
    %850 = vmatprep.subr.mxu0 0.0
    %v851 = vand.u32 %v56, 4294901760
    %v852 = vsub.f32 %v56, %v851
    %v853 = vand.u32 %v852, 4294901760
    %854 = vmatpush1.msra.mxu0 %v853
    %855 = vmatprep.subr.mxu0 0.0
    %v856 = vand.u32 %v57, 4294901760
    %v857 = vsub.f32 %v57, %v856
    %v858 = vand.u32 %v857, 4294901760
    %859 = vmatpush1.msra.mxu0 %v858
    %860 = vmatprep.subr.mxu0 0.0
    %v861 = vand.u32 %v58, 4294901760
    %v862 = vsub.f32 %v58, %v861
    %v863 = vand.u32 %v862, 4294901760
    %864 = vmatpush1.msra.mxu0 %v863
    %865 = vmatprep.subr.mxu0 0.0
    %v866 = vand.u32 %v59, 4294901760
    %v867 = vsub.f32 %v59, %v866
    %v868 = vand.u32 %v867, 4294901760
    %869 = vmatpush1.msra.mxu0 %v868
    %870 = vmatprep.subr.mxu0 0.0
    %v871 = vand.u32 %v60, 4294901760
    %v872 = vsub.f32 %v60, %v871
    %v873 = vand.u32 %v872, 4294901760
    %874 = vmatpush1.msra.mxu0 %v873
    %875 = vmatprep.subr.mxu0 0.0
    %v876 = vand.u32 %v61, 4294901760
    %v877 = vsub.f32 %v61, %v876
    %v878 = vand.u32 %v877, 4294901760
    %879 = vmatpush1.msra.mxu0 %v878
    %v880 = vand.u32 %v83, 4294901760
    %881 = vmatprep.mubr.f32.mxu0 %v880
    %v882 = vand.u32 %v82, 4294901760
    %883 = vmatmul.mubr.f32.gmra.mrb[0].mxu0 %v882
    %v884 = vpop.f32.mrb[0].mxu0
    %v885 = vadd.f32 %v706, %v884
    %v886 = vpop.f32.mrb[0].mxu0
    %v887 = vand.u32 %v85, 4294901760
    %888 = vmatprep.mubr.f32.mxu0 %v887
    %v889 = vand.u32 %v84, 4294901760
    %890 = vmatmul.mubr.f32.gmra.mrb[0].mxu0 %v889
    %v891 = vpop.f32.mrb[0].mxu0
    %v892 = vadd.f32 %v717, %v891
    %v893 = vpop.f32.mrb[0].mxu0
    %894 = vdwg.mxu0
    %895 = vmatprep.subr.mxu0 0.0
    %v896 = vand.u32 %v30, 4294901760
    %897 = vmatpush1.msra.mxu0 %v896
    %898 = vmatprep.subr.mxu0 0.0
    %v899 = vand.u32 %v31, 4294901760
    %900 = vmatpush1.msra.mxu0 %v899
    %901 = vmatprep.subr.mxu0 0.0
    %v902 = vand.u32 %v32, 4294901760
    %903 = vmatpush1.msra.mxu0 %v902
    %904 = vmatprep.subr.mxu0 0.0
    %v905 = vand.u32 %v33, 4294901760
    %906 = vmatpush1.msra.mxu0 %v905
    %907 = vmatprep.subr.mxu0 0.0
    %v908 = vand.u32 %v34, 4294901760
    %909 = vmatpush1.msra.mxu0 %v908
    %910 = vmatprep.subr.mxu0 0.0
    %v911 = vand.u32 %v35, 4294901760
    %912 = vmatpush1.msra.mxu0 %v911
    %913 = vmatprep.subr.mxu0 0.0
    %v914 = vand.u32 %v36, 4294901760
    %915 = vmatpush1.msra.mxu0 %v914
    %916 = vmatprep.subr.mxu0 0.0
    %v917 = vand.u32 %v37, 4294901760
    %918 = vmatpush1.msra.mxu0 %v917
    %919 = vmatprep.subr.mxu0 0.0
    %v920 = vand.u32 %v38, 4294901760
    %921 = vmatpush1.msra.mxu0 %v920
    %922 = vmatprep.subr.mxu0 0.0
    %v923 = vand.u32 %v39, 4294901760
    %924 = vmatpush1.msra.mxu0 %v923
    %925 = vmatprep.subr.mxu0 0.0
    %v926 = vand.u32 %v40, 4294901760
    %927 = vmatpush1.msra.mxu0 %v926
    %928 = vmatprep.subr.mxu0 0.0
    %v929 = vand.u32 %v41, 4294901760
    %930 = vmatpush1.msra.mxu0 %v929
    %931 = vmatprep.subr.mxu0 0.0
    %v932 = vand.u32 %v42, 4294901760
    %933 = vmatpush1.msra.mxu0 %v932
    %934 = vmatprep.subr.mxu0 0.0
    %v935 = vand.u32 %v43, 4294901760
    %936 = vmatpush1.msra.mxu0 %v935
    %937 = vmatprep.subr.mxu0 0.0
    %v938 = vand.u32 %v44, 4294901760
    %939 = vmatpush1.msra.mxu0 %v938
    %940 = vmatprep.subr.mxu0 0.0
    %v941 = vand.u32 %v45, 4294901760
    %942 = vmatpush1.msra.mxu0 %v941
    %943 = vmatprep.subr.mxu0 0.0
    %v944 = vand.u32 %v46, 4294901760
    %945 = vmatpush1.msra.mxu0 %v944
    %946 = vmatprep.subr.mxu0 0.0
    %v947 = vand.u32 %v47, 4294901760
    %948 = vmatpush1.msra.mxu0 %v947
    %949 = vmatprep.subr.mxu0 0.0
    %v950 = vand.u32 %v48, 4294901760
    %951 = vmatpush1.msra.mxu0 %v950
    %952 = vmatprep.subr.mxu0 0.0
    %v953 = vand.u32 %v49, 4294901760
    %954 = vmatpush1.msra.mxu0 %v953
    %955 = vmatprep.subr.mxu0 0.0
    %v956 = vand.u32 %v50, 4294901760
    %957 = vmatpush1.msra.mxu0 %v956
    %958 = vmatprep.subr.mxu0 0.0
    %v959 = vand.u32 %v51, 4294901760
    %960 = vmatpush1.msra.mxu0 %v959
    %961 = vmatprep.subr.mxu0 0.0
    %v962 = vand.u32 %v52, 4294901760
    %963 = vmatpush1.msra.mxu0 %v962
    %964 = vmatprep.subr.mxu0 0.0
    %v965 = vand.u32 %v53, 4294901760
    %966 = vmatpush1.msra.mxu0 %v965
    %967 = vmatprep.subr.mxu0 0.0
    %v968 = vand.u32 %v54, 4294901760
    %969 = vmatpush1.msra.mxu0 %v968
    %970 = vmatprep.subr.mxu0 0.0
    %v971 = vand.u32 %v55, 4294901760
    %972 = vmatpush1.msra.mxu0 %v971
    %973 = vmatprep.subr.mxu0 0.0
    %v974 = vand.u32 %v56, 4294901760
    %975 = vmatpush1.msra.mxu0 %v974
    %976 = vmatprep.subr.mxu0 0.0
    %v977 = vand.u32 %v57, 4294901760
    %978 = vmatpush1.msra.mxu0 %v977
    %979 = vmatprep.subr.mxu0 0.0
    %v980 = vand.u32 %v58, 4294901760
    %981 = vmatpush1.msra.mxu0 %v980
    %982 = vmatprep.subr.mxu0 0.0
    %v983 = vand.u32 %v59, 4294901760
    %984 = vmatpush1.msra.mxu0 %v983
    %985 = vmatprep.subr.mxu0 0.0
    %v986 = vand.u32 %v60, 4294901760
    %987 = vmatpush1.msra.mxu0 %v986
    %988 = vmatprep.subr.mxu0 0.0
    %v989 = vand.u32 %v61, 4294901760
    %990 = vmatpush1.msra.mxu0 %v989
    %v991 = vand.u32 %v83, 4294901760
    %992 = vmatprep.mubr.f32.mxu0 %v991
    %v993 = vand.u32 %v82, 4294901760
    %994 = vmatmul.mubr.f32.gmra.mrb[0].mxu0 %v993
    %v995 = vpop.f32.mrb[0].mxu0
    %v996 = vadd.f32 %v885, %v995
    %v997 = vpop.f32.mrb[0].mxu0
    %v998 = vand.u32 %v85, 4294901760
    %999 = vmatprep.mubr.f32.mxu0 %v998
    %v1000 = vand.u32 %v84, 4294901760
    %1001 = vmatmul.mubr.f32.gmra.mrb[0].mxu0 %v1000
    %v1002 = vpop.f32.mrb[0].mxu0
    %v1003 = vadd.f32 %v892, %v1002
    %v1004 = vpop.f32.mrb[0].mxu0
    %1005 = vdwg.mxu0
    %v1006 = vadd.f32 %v86, %v996
    %v1007 = vadd.f32 %v87, %v1003
    %1008 = vst [vmem:[#allocation2] sm:$0xff] %v1006
    %1009 = vst [vmem:[#allocation2 + $0x8] sm:$0xff] %v1007
    %v1010 = vld [vmem:[#allocation2] sm:$0xff]
    %v1011 = vld [vmem:[#allocation2 + $0x8] sm:$0xff]
    %1012 = vst [vmem:[#allocation6] sm:$0xff] %v1010
    %1013 = vst [vmem:[#allocation6 + $0x8] sm:$0xff] %v1011
    // Predicated region
    $region14: #{tpu_custom_call.1} parent=1 // pred_check
      _
    $region15: #{tpu_custom_call.1} parent=1 // pred_check_branch
      %1015 = sbr.rel (0) target = $region17
    $region16: #{tpu_custom_call.1} parent=1 // pred_region
      %s1017 = ssub.s32 256, 256
      %1018 = vsyncadd [#allocation5], %s1017
      %s1019 = sshll.u32 [#allocation6], 4
      %s1020 = int_to_ptr.vmem [resolvable:$true] %s1019
      %1025 = dma.vmem_to_hbm [thread:$0]  %s1020, 256, %s2, [#allocation5], 128, 128, 8
    $region17: #{tpu_custom_call.1} parent=1 // pred_fallthru
      _
    // Predicated region
    $region18: #{tpu_custom_call.1} parent=1 // pred_check
      _
    $region19: #{tpu_custom_call.1} parent=1 // pred_check_branch
      %1027 = sbr.rel (0) target = $region21
    $region20: #{tpu_custom_call.1} parent=1 // pred_region
      %1028 = dma.done [#allocation5], 256
    $region21: #{tpu_custom_call.1} parent=1 // pred_fallthru
      _
    %1029 = vsyncpa [#allocation4], 1
    %1030 = vsyncpa [#allocation5], 1

// kernel: tpu_custom_call.1
$region0: #{tpu_custom_call.1}
  #allocation0 [shape = 'u32[]', space=smem, size = 0x4, offset = 0x4, fixed_abs, tag = 'smem constant byte address 0x4 - core index']
  #allocation1 [shape = 'u32[144,128]{1,0:T(1,128)}', space=vmem, size = 0x12000, scoped, tag = 'internal scratch']
  #allocation2 [shape = 'f32[16,128]{1,0:T(8,128)}', space=vmem, size = 0x2000, scoped, tag = 'scratch operand']
  %s0 = inlined_call_operand.vmem [shape: s32[16,1], index: 0, kind: input, shape index: {}]
  %s1 = inlined_call_operand.hbm [shape: f32[256,128], index: 1, kind: input, shape index: {}]
  %s2 = inlined_call_operand.hbm [shape: f32[16,128], index: 2, kind: output, shape index: {}]
  %s3 = sld [smem:[#allocation0]]
  $region22: #{tpu_custom_call.1} parent=0
    _
  %s5 = ssub.s32 1, %s3
  %s6 = scalar_select 0, %s5, %s3
  $region1: #{tpu_custom_call.1} parent=0
    #allocation3 [shape = 'u8[131072]{0}', space=vmem, size = 0x20000, scoped, tag = 'input window, operand 1, single buffered']
    #allocation4 [shape = 's32[1]{0}', space=sflag, size = 0x4, scoped, tag = 'scoped memory for tpu_custom_call.1']
    #allocation5 [shape = 's32[1]{0}', space=sflag, size = 0x4, scoped, tag = 'scoped memory for tpu_custom_call.1']
    #allocation6 [shape = 'u8[8192]{0}', space=vmem, size = 0x2000, scoped, tag = 'output window, operand 0, single buffered']
    %7 = vsyncpa [#allocation4], 0
    %8 = vsyncpa [#allocation5], 0
    // Predicated region
    $region2: #{tpu_custom_call.1} parent=1 // pred_check
      _
    $region3: #{tpu_custom_call.1} parent=1 // pred_check_branch
      %10 = sbr.rel (0) target = $region5
    $region4: #{tpu_custom_call.1} parent=1 // pred_region
      _
    $region5: #{tpu_custom_call.1} parent=1 // pred_fallthru
      _
    // Predicated region
    $region6: #{tpu_custom_call.1} parent=1 // pred_check
      _
    $region7: #{tpu_custom_call.1} parent=1 // pred_check_branch
      %12 = sbr.rel (0) target = $region9
    $region8: #{tpu_custom_call.1} parent=1 // pred_region
      %s14 = ssub.s32 4096, 4096
      %15 = vsyncadd [#allocation4], %s14
      %s16 = sshll.u32 [#allocation3], 4
      %s17 = int_to_ptr.vmem [resolvable:$true] %s16
      %22 = dma.hbm_to_vmem [thread:$0]  %s1, 4096, %s17, [#allocation4], 128, 128, 8
    $region9: #{tpu_custom_call.1} parent=1 // pred_fallthru
      _
    // Predicated region
    $region10: #{tpu_custom_call.1} parent=1 // pred_check
      _
    $region11: #{tpu_custom_call.1} parent=1 // pred_check_branch
      %24 = sbr.rel (0) target = $region13
    $region12: #{tpu_custom_call.1} parent=1 // pred_region
      %25 = dma.done [#allocation4], 4096
    $region13: #{tpu_custom_call.1} parent=1 // pred_fallthru
      _
    %v26 = vld [vmem:[%s0] sm:$0xff]
    %v27 = vld [vmem:[%s0 + $0x8] sm:$0xff]
    %28 = vst [vmem:[#allocation2] sm:$0xff] 0.0
    %29 = vst [vmem:[#allocation2 + $0x8] sm:$0xff] 0.0
    %v30 = vld [vmem:[#allocation3] sm:$0xff]
    %v31 = vld [vmem:[#allocation3 + $0x8] sm:$0xff]
    %v32 = vld [vmem:[#allocation3 + $0x10] sm:$0xff]
    %v33 = vld [vmem:[#allocation3 + $0x18] sm:$0xff]
    %v34 = vld [vmem:[#allocation3 + $0x20] sm:$0xff]
    %v35 = vld [vmem:[#allocation3 + $0x28] sm:$0xff]
    %v36 = vld [vmem:[#allocation3 + $0x30] sm:$0xff]
    %v37 = vld [vmem:[#allocation3 + $0x38] sm:$0xff]
    %v38 = vld [vmem:[#allocation3 + $0x40] sm:$0xff]
    %v39 = vld [vmem:[#allocation3 + $0x48] sm:$0xff]
    %v40 = vld [vmem:[#allocation3 + $0x50] sm:$0xff]
    %v41 = vld [vmem:[#allocation3 + $0x58] sm:$0xff]
    %v42 = vld [vmem:[#allocation3 + $0x60] sm:$0xff]
    %v43 = vld [vmem:[#allocation3 + $0x68] sm:$0xff]
    %v44 = vld [vmem:[#allocation3 + $0x70] sm:$0xff]
    %v45 = vld [vmem:[#allocation3 + $0x78] sm:$0xff]
    %v46 = vld [vmem:[#allocation3 + $0x80] sm:$0xff]
    %v47 = vld [vmem:[#allocation3 + $0x88] sm:$0xff]
    %v48 = vld [vmem:[#allocation3 + $0x90] sm:$0xff]
    %v49 = vld [vmem:[#allocation3 + $0x98] sm:$0xff]
    %v50 = vld [vmem:[#allocation3 + $0xa0] sm:$0xff]
    %v51 = vld [vmem:[#allocation3 + $0xa8] sm:$0xff]
    %v52 = vld [vmem:[#allocation3 + $0xb0] sm:$0xff]
    %v53 = vld [vmem:[#allocation3 + $0xb8] sm:$0xff]
    %v54 = vld [vmem:[#allocation3 + $0xc0] sm:$0xff]
    %v55 = vld [vmem:[#allocation3 + $0xc8] sm:$0xff]
    %v56 = vld [vmem:[#allocation3 + $0xd0] sm:$0xff]
    %v57 = vld [vmem:[#allocation3 + $0xd8] sm:$0xff]
    %v58 = vld [vmem:[#allocation3 + $0xe0] sm:$0xff]
    %v59 = vld [vmem:[#allocation3 + $0xe8] sm:$0xff]
    %v60 = vld [vmem:[#allocation3 + $0xf0] sm:$0xff]
    %v61 = vld [vmem:[#allocation3 + $0xf8] sm:$0xff]
    %v62 = vlaneseq
    %v63 = vand.u32 %v62, 127
    %v64 = vadd.s32 %v63, 128
    %v65 = vstv 0
    %v66 = vadd.s32 %v63, %v65
    %v67 = vadd.s32 %v64, %v65
    %68 = vset.pattern.permute.xlu0 0
    %69 = vperm.xlu0 %68, %v26
    %v70 = vpop.permute.xlu0 %69
    %71 = vset.pattern.permute.xlu0 0
    %72 = vperm.xlu0 %71, %v27
    %v73 = vpop.permute.xlu0 %72
    %vm74 = vcmp.eq.s32.totalorder %v70, %v66
    %vm75 = vcmp.eq.s32.totalorder %v70, %v67
    %vm76 = vcmp.eq.s32.totalorder %v73, %v66
    %vm77 = vcmp.eq.s32.totalorder %v73, %v67
    %v78 = vsel %vm74, 1, 0
    %v79 = vsel %vm75, 1, 0
    %v80 = vsel %vm76, 1, 0
    %v81 = vsel %vm77, 1, 0
    %v82 = vcvt.s32.f32 %v78
    %v83 = vcvt.s32.f32 %v79
    %v84 = vcvt.s32.f32 %v80
    %v85 = vcvt.s32.f32 %v81
    %v86 = vld [vmem:[#allocation2] sm:$0xff]
    %v87 = vld [vmem:[#allocation2 + $0x8] sm:$0xff]
    %88 = vmatprep.subr.mxu0 0.0
    %v89 = vand.u32 %v30, 4294901760
    %90 = vmatpush1.msra.mxu0 %v89
    %91 = vmatprep.subr.mxu0 0.0
    %v92 = vand.u32 %v31, 4294901760
    %93 = vmatpush1.msra.mxu0 %v92
    %94 = vmatprep.subr.mxu0 0.0
    %v95 = vand.u32 %v32, 4294901760
    %96 = vmatpush1.msra.mxu0 %v95
    %97 = vmatprep.subr.mxu0 0.0
    %v98 = vand.u32 %v33, 4294901760
    %99 = vmatpush1.msra.mxu0 %v98
    %100 = vmatprep.subr.mxu0 0.0
    %v101 = vand.u32 %v34, 4294901760
    %102 = vmatpush1.msra.mxu0 %v101
    %103 = vmatprep.subr.mxu0 0.0
    %v104 = vand.u32 %v35, 4294901760
    %105 = vmatpush1.msra.mxu0 %v104
    %106 = vmatprep.subr.mxu0 0.0
    %v107 = vand.u32 %v36, 4294901760
    %108 = vmatpush1.msra.mxu0 %v107
    %109 = vmatprep.subr.mxu0 0.0
    %v110 = vand.u32 %v37, 4294901760
    %111 = vmatpush1.msra.mxu0 %v110
    %112 = vmatprep.subr.mxu0 0.0
    %v113 = vand.u32 %v38, 4294901760
    %114 = vmatpush1.msra.mxu0 %v113
    %115 = vmatprep.subr.mxu0 0.0
    %v116 = vand.u32 %v39, 4294901760
    %117 = vmatpush1.msra.mxu0 %v116
    %118 = vmatprep.subr.mxu0 0.0
    %v119 = vand.u32 %v40, 4294901760
    %120 = vmatpush1.msra.mxu0 %v119
    %121 = vmatprep.subr.mxu0 0.0
    %v122 = vand.u32 %v41, 4294901760
    %123 = vmatpush1.msra.mxu0 %v122
    %124 = vmatprep.subr.mxu0 0.0
    %v125 = vand.u32 %v42, 4294901760
    %126 = vmatpush1.msra.mxu0 %v125
    %127 = vmatprep.subr.mxu0 0.0
    %v128 = vand.u32 %v43, 4294901760
    %129 = vmatpush1.msra.mxu0 %v128
    %130 = vmatprep.subr.mxu0 0.0
    %v131 = vand.u32 %v44, 4294901760
    %132 = vmatpush1.msra.mxu0 %v131
    %133 = vmatprep.subr.mxu0 0.0
    %v134 = vand.u32 %v45, 4294901760
    %135 = vmatpush1.msra.mxu0 %v134
    %136 = vmatprep.subr.mxu0 0.0
    %v137 = vand.u32 %v46, 4294901760
    %138 = vmatpush1.msra.mxu0 %v137
    %139 = vmatprep.subr.mxu0 0.0
    %v140 = vand.u32 %v47, 4294901760
    %141 = vmatpush1.msra.mxu0 %v140
    %142 = vmatprep.subr.mxu0 0.0
    %v143 = vand.u32 %v48, 4294901760
    %144 = vmatpush1.msra.mxu0 %v143
    %145 = vmatprep.subr.mxu0 0.0
    %v146 = vand.u32 %v49, 4294901760
    %147 = vmatpush1.msra.mxu0 %v146
    %148 = vmatprep.subr.mxu0 0.0
    %v149 = vand.u32 %v50, 4294901760
    %150 = vmatpush1.msra.mxu0 %v149
    %151 = vmatprep.subr.mxu0 0.0
    %v152 = vand.u32 %v51, 4294901760
    %153 = vmatpush1.msra.mxu0 %v152
    %154 = vmatprep.subr.mxu0 0.0
    %v155 = vand.u32 %v52, 4294901760
    %156 = vmatpush1.msra.mxu0 %v155
    %157 = vmatprep.subr.mxu0 0.0
    %v158 = vand.u32 %v53, 4294901760
    %159 = vmatpush1.msra.mxu0 %v158
    %160 = vmatprep.subr.mxu0 0.0
    %v161 = vand.u32 %v54, 4294901760
    %162 = vmatpush1.msra.mxu0 %v161
    %163 = vmatprep.subr.mxu0 0.0
    %v164 = vand.u32 %v55, 4294901760
    %165 = vmatpush1.msra.mxu0 %v164
    %166 = vmatprep.subr.mxu0 0.0
    %v167 = vand.u32 %v56, 4294901760
    %168 = vmatpush1.msra.mxu0 %v167
    %169 = vmatprep.subr.mxu0 0.0
    %v170 = vand.u32 %v57, 4294901760
    %171 = vmatpush1.msra.mxu0 %v170
    %172 = vmatprep.subr.mxu0 0.0
    %v173 = vand.u32 %v58, 4294901760
    %174 = vmatpush1.msra.mxu0 %v173
    %175 = vmatprep.subr.mxu0 0.0
    %v176 = vand.u32 %v59, 4294901760
    %177 = vmatpush1.msra.mxu0 %v176
    %178 = vmatprep.subr.mxu0 0.0
    %v179 = vand.u32 %v60, 4294901760
    %180 = vmatpush1.msra.mxu0 %v179
    %181 = vmatprep.subr.mxu0 0.0
    %v182 = vand.u32 %v61, 4294901760
    %183 = vmatpush1.msra.mxu0 %v182
    %v184 = vand.u32 %v83, 4294901760
    %v185 = vsub.f32 %v83, %v184
    %v186 = vand.u32 %v185, 4294901760
    %v187 = vsub.f32 %v185, %v186
    %v188 = vand.u32 %v187, 4294901760
    %189 = vmatprep.mubr.f32.mxu0 %v188
    %v190 = vand.u32 %v82, 4294901760
    %v191 = vsub.f32 %v82, %v190
    %v192 = vand.u32 %v191, 4294901760
    %v193 = vsub.f32 %v191, %v192
    %v194 = vand.u32 %v193, 4294901760
    %195 = vmatmul.mubr.f32.gmra.mrb[0].mxu0 %v194
    %v196 = vpop.f32.mrb[0].mxu0
    %v197 = vadd.f32 0.0, %v196
    %v198 = vpop.f32.mrb[0].mxu0
    %v199 = vand.u32 %v85, 4294901760
    %v200 = vsub.f32 %v85, %v199
    %v201 = vand.u32 %v200, 4294901760
    %v202 = vsub.f32 %v200, %v201
    %v203 = vand.u32 %v202, 4294901760
    %204 = vmatprep.mubr.f32.mxu0 %v203
    %v205 = vand.u32 %v84, 4294901760
    %v206 = vsub.f32 %v84, %v205
    %v207 = vand.u32 %v206, 4294901760
    %v208 = vsub.f32 %v206, %v207
    %v209 = vand.u32 %v208, 4294901760
    %210 = vmatmul.mubr.f32.gmra.mrb[0].mxu0 %v209
    %v211 = vpop.f32.mrb[0].mxu0
    %v212 = vadd.f32 0.0, %v211
    %v213 = vpop.f32.mrb[0].mxu0
    %214 = vdwg.mxu0
    %215 = vmatprep.subr.mxu0 0.0
    %v216 = vand.u32 %v30, 4294901760
    %v217 = vsub.f32 %v30, %v216
    %v218 = vand.u32 %v217, 4294901760
    %v219 = vsub.f32 %v217, %v218
    %v220 = vand.u32 %v219, 4294901760
    %221 = vmatpush1.msra.mxu0 %v220
    %222 = vmatprep.subr.mxu0 0.0
    %v223 = vand.u32 %v31, 4294901760
    %v224 = vsub.f32 %v31, %v223
    %v225 = vand.u32 %v224, 4294901760
    %v226 = vsub.f32 %v224, %v225
    %v227 = vand.u32 %v226, 4294901760
    %228 = vmatpush1.msra.mxu0 %v227
    %229 = vmatprep.subr.mxu0 0.0
    %v230 = vand.u32 %v32, 4294901760
    %v231 = vsub.f32 %v32, %v230
    %v232 = vand.u32 %v231, 4294901760
    %v233 = vsub.f32 %v231, %v232
    %v234 = vand.u32 %v233, 4294901760
    %235 = vmatpush1.msra.mxu0 %v234
    %236 = vmatprep.subr.mxu0 0.0
    %v237 = vand.u32 %v33, 4294901760
    %v238 = vsub.f32 %v33, %v237
    %v239 = vand.u32 %v238, 4294901760
    %v240 = vsub.f32 %v238, %v239
    %v241 = vand.u32 %v240, 4294901760
    %242 = vmatpush1.msra.mxu0 %v241
    %243 = vmatprep.subr.mxu0 0.0
    %v244 = vand.u32 %v34, 4294901760
    %v245 = vsub.f32 %v34, %v244
    %v246 = vand.u32 %v245, 4294901760
    %v247 = vsub.f32 %v245, %v246
    %v248 = vand.u32 %v247, 4294901760
    %249 = vmatpush1.msra.mxu0 %v248
    %250 = vmatprep.subr.mxu0 0.0
    %v251 = vand.u32 %v35, 4294901760
    %v252 = vsub.f32 %v35, %v251
    %v253 = vand.u32 %v252, 4294901760
    %v254 = vsub.f32 %v252, %v253
    %v255 = vand.u32 %v254, 4294901760
    %256 = vmatpush1.msra.mxu0 %v255
    %257 = vmatprep.subr.mxu0 0.0
    %v258 = vand.u32 %v36, 4294901760
    %v259 = vsub.f32 %v36, %v258
    %v260 = vand.u32 %v259, 4294901760
    %v261 = vsub.f32 %v259, %v260
    %v262 = vand.u32 %v261, 4294901760
    %263 = vmatpush1.msra.mxu0 %v262
    %264 = vmatprep.subr.mxu0 0.0
    %v265 = vand.u32 %v37, 4294901760
    %v266 = vsub.f32 %v37, %v265
    %v267 = vand.u32 %v266, 4294901760
    %v268 = vsub.f32 %v266, %v267
    %v269 = vand.u32 %v268, 4294901760
    %270 = vmatpush1.msra.mxu0 %v269
    %271 = vmatprep.subr.mxu0 0.0
    %v272 = vand.u32 %v38, 4294901760
    %v273 = vsub.f32 %v38, %v272
    %v274 = vand.u32 %v273, 4294901760
    %v275 = vsub.f32 %v273, %v274
    %v276 = vand.u32 %v275, 4294901760
    %277 = vmatpush1.msra.mxu0 %v276
    %278 = vmatprep.subr.mxu0 0.0
    %v279 = vand.u32 %v39, 4294901760
    %v280 = vsub.f32 %v39, %v279
    %v281 = vand.u32 %v280, 4294901760
    %v282 = vsub.f32 %v280, %v281
    %v283 = vand.u32 %v282, 4294901760
    %284 = vmatpush1.msra.mxu0 %v283
    %285 = vmatprep.subr.mxu0 0.0
    %v286 = vand.u32 %v40, 4294901760
    %v287 = vsub.f32 %v40, %v286
    %v288 = vand.u32 %v287, 4294901760
    %v289 = vsub.f32 %v287, %v288
    %v290 = vand.u32 %v289, 4294901760
    %291 = vmatpush1.msra.mxu0 %v290
    %292 = vmatprep.subr.mxu0 0.0
    %v293 = vand.u32 %v41, 4294901760
    %v294 = vsub.f32 %v41, %v293
    %v295 = vand.u32 %v294, 4294901760
    %v296 = vsub.f32 %v294, %v295
    %v297 = vand.u32 %v296, 4294901760
    %298 = vmatpush1.msra.mxu0 %v297
    %299 = vmatprep.subr.mxu0 0.0
    %v300 = vand.u32 %v42, 4294901760
    %v301 = vsub.f32 %v42, %v300
    %v302 = vand.u32 %v301, 4294901760
    %v303 = vsub.f32 %v301, %v302
    %v304 = vand.u32 %v303, 4294901760
    %305 = vmatpush1.msra.mxu0 %v304
    %306 = vmatprep.subr.mxu0 0.0
    %v307 = vand.u32 %v43, 4294901760
    %v308 = vsub.f32 %v43, %v307
    %v309 = vand.u32 %v308, 4294901760
    %v310 = vsub.f32 %v308, %v309
    %v311 = vand.u32 %v310, 4294901760
    %312 = vmatpush1.msra.mxu0 %v311
    %313 = vmatprep.subr.mxu0 0.0
    %v314 = vand.u32 %v44, 4294901760
    %v315 = vsub.f32 %v44, %v314
    %v316 = vand.u32 %v315, 4294901760
    %v317 = vsub.f32 %v315, %v316
    %v318 = vand.u32 %v317, 4294901760
    %319 = vmatpush1.msra.mxu0 %v318
    %320 = vmatprep.subr.mxu0 0.0
    %v321 = vand.u32 %v45, 4294901760
    %v322 = vsub.f32 %v45, %v321
    %v323 = vand.u32 %v322, 4294901760
    %v324 = vsub.f32 %v322, %v323
    %v325 = vand.u32 %v324, 4294901760
    %326 = vmatpush1.msra.mxu0 %v325
    %327 = vmatprep.subr.mxu0 0.0
    %v328 = vand.u32 %v46, 4294901760
    %v329 = vsub.f32 %v46, %v328
    %v330 = vand.u32 %v329, 4294901760
    %v331 = vsub.f32 %v329, %v330
    %v332 = vand.u32 %v331, 4294901760
    %333 = vmatpush1.msra.mxu0 %v332
    %334 = vmatprep.subr.mxu0 0.0
    %v335 = vand.u32 %v47, 4294901760
    %v336 = vsub.f32 %v47, %v335
    %v337 = vand.u32 %v336, 4294901760
    %v338 = vsub.f32 %v336, %v337
    %v339 = vand.u32 %v338, 4294901760
    %340 = vmatpush1.msra.mxu0 %v339
    %341 = vmatprep.subr.mxu0 0.0
    %v342 = vand.u32 %v48, 4294901760
    %v343 = vsub.f32 %v48, %v342
    %v344 = vand.u32 %v343, 4294901760
    %v345 = vsub.f32 %v343, %v344
    %v346 = vand.u32 %v345, 4294901760
    %347 = vmatpush1.msra.mxu0 %v346
    %348 = vmatprep.subr.mxu0 0.0
    %v349 = vand.u32 %v49, 4294901760
    %v350 = vsub.f32 %v49, %v349
    %v351 = vand.u32 %v350, 4294901760
    %v352 = vsub.f32 %v350, %v351
    %v353 = vand.u32 %v352, 4294901760
    %354 = vmatpush1.msra.mxu0 %v353
    %355 = vmatprep.subr.mxu0 0.0
    %v356 = vand.u32 %v50, 4294901760
    %v357 = vsub.f32 %v50, %v356
    %v358 = vand.u32 %v357, 4294901760
    %v359 = vsub.f32 %v357, %v358
    %v360 = vand.u32 %v359, 4294901760
    %361 = vmatpush1.msra.mxu0 %v360
    %362 = vmatprep.subr.mxu0 0.0
    %v363 = vand.u32 %v51, 4294901760
    %v364 = vsub.f32 %v51, %v363
    %v365 = vand.u32 %v364, 4294901760
    %v366 = vsub.f32 %v364, %v365
    %v367 = vand.u32 %v366, 4294901760
    %368 = vmatpush1.msra.mxu0 %v367
    %369 = vmatprep.subr.mxu0 0.0
    %v370 = vand.u32 %v52, 4294901760
    %v371 = vsub.f32 %v52, %v370
    %v372 = vand.u32 %v371, 4294901760
    %v373 = vsub.f32 %v371, %v372
    %v374 = vand.u32 %v373, 4294901760
    %375 = vmatpush1.msra.mxu0 %v374
    %376 = vmatprep.subr.mxu0 0.0
    %v377 = vand.u32 %v53, 4294901760
    %v378 = vsub.f32 %v53, %v377
    %v379 = vand.u32 %v378, 4294901760
    %v380 = vsub.f32 %v378, %v379
    %v381 = vand.u32 %v380, 4294901760
    %382 = vmatpush1.msra.mxu0 %v381
    %383 = vmatprep.subr.mxu0 0.0
    %v384 = vand.u32 %v54, 4294901760
    %v385 = vsub.f32 %v54, %v384
    %v386 = vand.u32 %v385, 4294901760
    %v387 = vsub.f32 %v385, %v386
    %v388 = vand.u32 %v387, 4294901760
    %389 = vmatpush1.msra.mxu0 %v388
    %390 = vmatprep.subr.mxu0 0.0
    %v391 = vand.u32 %v55, 4294901760
    %v392 = vsub.f32 %v55, %v391
    %v393 = vand.u32 %v392, 4294901760
    %v394 = vsub.f32 %v392, %v393
    %v395 = vand.u32 %v394, 4294901760
    %396 = vmatpush1.msra.mxu0 %v395
    %397 = vmatprep.subr.mxu0 0.0
    %v398 = vand.u32 %v56, 4294901760
    %v399 = vsub.f32 %v56, %v398
    %v400 = vand.u32 %v399, 4294901760
    %v401 = vsub.f32 %v399, %v400
    %v402 = vand.u32 %v401, 4294901760
    %403 = vmatpush1.msra.mxu0 %v402
    %404 = vmatprep.subr.mxu0 0.0
    %v405 = vand.u32 %v57, 4294901760
    %v406 = vsub.f32 %v57, %v405
    %v407 = vand.u32 %v406, 4294901760
    %v408 = vsub.f32 %v406, %v407
    %v409 = vand.u32 %v408, 4294901760
    %410 = vmatpush1.msra.mxu0 %v409
    %411 = vmatprep.subr.mxu0 0.0
    %v412 = vand.u32 %v58, 4294901760
    %v413 = vsub.f32 %v58, %v412
    %v414 = vand.u32 %v413, 4294901760
    %v415 = vsub.f32 %v413, %v414
    %v416 = vand.u32 %v415, 4294901760
    %417 = vmatpush1.msra.mxu0 %v416
    %418 = vmatprep.subr.mxu0 0.0
    %v419 = vand.u32 %v59, 4294901760
    %v420 = vsub.f32 %v59, %v419
    %v421 = vand.u32 %v420, 4294901760
    %v422 = vsub.f32 %v420, %v421
    %v423 = vand.u32 %v422, 4294901760
    %424 = vmatpush1.msra.mxu0 %v423
    %425 = vmatprep.subr.mxu0 0.0
    %v426 = vand.u32 %v60, 4294901760
    %v427 = vsub.f32 %v60, %v426
    %v428 = vand.u32 %v427, 4294901760
    %v429 = vsub.f32 %v427, %v428
    %v430 = vand.u32 %v429, 4294901760
    %431 = vmatpush1.msra.mxu0 %v430
    %432 = vmatprep.subr.mxu0 0.0
    %v433 = vand.u32 %v61, 4294901760
    %v434 = vsub.f32 %v61, %v433
    %v435 = vand.u32 %v434, 4294901760
    %v436 = vsub.f32 %v434, %v435
    %v437 = vand.u32 %v436, 4294901760
    %438 = vmatpush1.msra.mxu0 %v437
    %v439 = vand.u32 %v83, 4294901760
    %440 = vmatprep.mubr.f32.mxu0 %v439
    %v441 = vand.u32 %v82, 4294901760
    %442 = vmatmul.mubr.f32.gmra.mrb[0].mxu0 %v441
    %v443 = vpop.f32.mrb[0].mxu0
    %v444 = vadd.f32 %v197, %v443
    %v445 = vpop.f32.mrb[0].mxu0
    %v446 = vand.u32 %v85, 4294901760
    %447 = vmatprep.mubr.f32.mxu0 %v446
    %v448 = vand.u32 %v84, 4294901760
    %449 = vmatmul.mubr.f32.gmra.mrb[0].mxu0 %v448
    %v450 = vpop.f32.mrb[0].mxu0
    %v451 = vadd.f32 %v212, %v450
    %v452 = vpop.f32.mrb[0].mxu0
    %453 = vdwg.mxu0
    %454 = vmatprep.subr.mxu0 0.0
    %v455 = vand.u32 %v30, 4294901760
    %v456 = vsub.f32 %v30, %v455
    %457 = vmatpush1.msra.mxu0 %v456
    %458 = vmatprep.subr.mxu0 0.0
    %v459 = vand.u32 %v31, 4294901760
    %v460 = vsub.f32 %v31, %v459
    %461 = vmatpush1.msra.mxu0 %v460
    %462 = vmatprep.subr.mxu0 0.0
    %v463 = vand.u32 %v32, 4294901760
    %v464 = vsub.f32 %v32, %v463
    %465 = vmatpush1.msra.mxu0 %v464
    %466 = vmatprep.subr.mxu0 0.0
    %v467 = vand.u32 %v33, 4294901760
    %v468 = vsub.f32 %v33, %v467
    %469 = vmatpush1.msra.mxu0 %v468
    %470 = vmatprep.subr.mxu0 0.0
    %v471 = vand.u32 %v34, 4294901760
    %v472 = vsub.f32 %v34, %v471
    %473 = vmatpush1.msra.mxu0 %v472
    %474 = vmatprep.subr.mxu0 0.0
    %v475 = vand.u32 %v35, 4294901760
    %v476 = vsub.f32 %v35, %v475
    %477 = vmatpush1.msra.mxu0 %v476
    %478 = vmatprep.subr.mxu0 0.0
    %v479 = vand.u32 %v36, 4294901760
    %v480 = vsub.f32 %v36, %v479
    %481 = vmatpush1.msra.mxu0 %v480
    %482 = vmatprep.subr.mxu0 0.0
    %v483 = vand.u32 %v37, 4294901760
    %v484 = vsub.f32 %v37, %v483
    %485 = vmatpush1.msra.mxu0 %v484
    %486 = vmatprep.subr.mxu0 0.0
    %v487 = vand.u32 %v38, 4294901760
    %v488 = vsub.f32 %v38, %v487
    %489 = vmatpush1.msra.mxu0 %v488
    %490 = vmatprep.subr.mxu0 0.0
    %v491 = vand.u32 %v39, 4294901760
    %v492 = vsub.f32 %v39, %v491
    %493 = vmatpush1.msra.mxu0 %v492
    %494 = vmatprep.subr.mxu0 0.0
    %v495 = vand.u32 %v40, 4294901760
    %v496 = vsub.f32 %v40, %v495
    %497 = vmatpush1.msra.mxu0 %v496
    %498 = vmatprep.subr.mxu0 0.0
    %v499 = vand.u32 %v41, 4294901760
    %v500 = vsub.f32 %v41, %v499
    %501 = vmatpush1.msra.mxu0 %v500
    %502 = vmatprep.subr.mxu0 0.0
    %v503 = vand.u32 %v42, 4294901760
    %v504 = vsub.f32 %v42, %v503
    %505 = vmatpush1.msra.mxu0 %v504
    %506 = vmatprep.subr.mxu0 0.0
    %v507 = vand.u32 %v43, 4294901760
    %v508 = vsub.f32 %v43, %v507
    %509 = vmatpush1.msra.mxu0 %v508
    %510 = vmatprep.subr.mxu0 0.0
    %v511 = vand.u32 %v44, 4294901760
    %v512 = vsub.f32 %v44, %v511
    %513 = vmatpush1.msra.mxu0 %v512
    %514 = vmatprep.subr.mxu0 0.0
    %v515 = vand.u32 %v45, 4294901760
    %v516 = vsub.f32 %v45, %v515
    %517 = vmatpush1.msra.mxu0 %v516
    %518 = vmatprep.subr.mxu0 0.0
    %v519 = vand.u32 %v46, 4294901760
    %v520 = vsub.f32 %v46, %v519
    %521 = vmatpush1.msra.mxu0 %v520
    %522 = vmatprep.subr.mxu0 0.0
    %v523 = vand.u32 %v47, 4294901760
    %v524 = vsub.f32 %v47, %v523
    %525 = vmatpush1.msra.mxu0 %v524
    %526 = vmatprep.subr.mxu0 0.0
    %v527 = vand.u32 %v48, 4294901760
    %v528 = vsub.f32 %v48, %v527
    %529 = vmatpush1.msra.mxu0 %v528
    %530 = vmatprep.subr.mxu0 0.0
    %v531 = vand.u32 %v49, 4294901760
    %v532 = vsub.f32 %v49, %v531
    %533 = vmatpush1.msra.mxu0 %v532
    %534 = vmatprep.subr.mxu0 0.0
    %v535 = vand.u32 %v50, 4294901760
    %v536 = vsub.f32 %v50, %v535
    %537 = vmatpush1.msra.mxu0 %v536
    %538 = vmatprep.subr.mxu0 0.0
    %v539 = vand.u32 %v51, 4294901760
    %v540 = vsub.f32 %v51, %v539
    %541 = vmatpush1.msra.mxu0 %v540
    %542 = vmatprep.subr.mxu0 0.0
    %v543 = vand.u32 %v52, 4294901760
    %v544 = vsub.f32 %v52, %v543
    %545 = vmatpush1.msra.mxu0 %v544
    %546 = vmatprep.subr.mxu0 0.0
    %v547 = vand.u32 %v53, 4294901760
    %v548 = vsub.f32 %v53, %v547
    %549 = vmatpush1.msra.mxu0 %v548
    %550 = vmatprep.subr.mxu0 0.0
    %v551 = vand.u32 %v54, 4294901760
    %v552 = vsub.f32 %v54, %v551
    %553 = vmatpush1.msra.mxu0 %v552
    %554 = vmatprep.subr.mxu0 0.0
    %v555 = vand.u32 %v55, 4294901760
    %v556 = vsub.f32 %v55, %v555
    %557 = vmatpush1.msra.mxu0 %v556
    %558 = vmatprep.subr.mxu0 0.0
    %v559 = vand.u32 %v56, 4294901760
    %v560 = vsub.f32 %v56, %v559
    %561 = vmatpush1.msra.mxu0 %v560
    %562 = vmatprep.subr.mxu0 0.0
    %v563 = vand.u32 %v57, 4294901760
    %v564 = vsub.f32 %v57, %v563
    %565 = vmatpush1.msra.mxu0 %v564
    %566 = vmatprep.subr.mxu0 0.0
    %v567 = vand.u32 %v58, 4294901760
    %v568 = vsub.f32 %v58, %v567
    %569 = vmatpush1.msra.mxu0 %v568
    %570 = vmatprep.subr.mxu0 0.0
    %v571 = vand.u32 %v59, 4294901760
    %v572 = vsub.f32 %v59, %v571
    %573 = vmatpush1.msra.mxu0 %v572
    %574 = vmatprep.subr.mxu0 0.0
    %v575 = vand.u32 %v60, 4294901760
    %v576 = vsub.f32 %v60, %v575
    %577 = vmatpush1.msra.mxu0 %v576
    %578 = vmatprep.subr.mxu0 0.0
    %v579 = vand.u32 %v61, 4294901760
    %v580 = vsub.f32 %v61, %v579
    %581 = vmatpush1.msra.mxu0 %v580
    %v582 = vand.u32 %v83, 4294901760
    %v583 = vsub.f32 %v83, %v582
    %584 = vmatprep.mubr.f32.mxu0 %v583
    %v585 = vand.u32 %v82, 4294901760
    %v586 = vsub.f32 %v82, %v585
    %587 = vmatmul.mubr.f32.gmra.mrb[0].mxu0 %v586
    %v588 = vpop.f32.mrb[0].mxu0
    %v589 = vadd.f32 %v444, %v588
    %v590 = vpop.f32.mrb[0].mxu0
    %v591 = vand.u32 %v85, 4294901760
    %v592 = vsub.f32 %v85, %v591
    %593 = vmatprep.mubr.f32.mxu0 %v592
    %v594 = vand.u32 %v84, 4294901760
    %v595 = vsub.f32 %v84, %v594
    %596 = vmatmul.mubr.f32.gmra.mrb[0].mxu0 %v595
    %v597 = vpop.f32.mrb[0].mxu0
    %v598 = vadd.f32 %v451, %v597
    %v599 = vpop.f32.mrb[0].mxu0
    %600 = vdwg.mxu0
    %601 = vmatprep.subr.mxu0 0.0
    %v602 = vand.u32 %v30, 4294901760
    %603 = vmatpush1.msra.mxu0 %v602
    %604 = vmatprep.subr.mxu0 0.0
    %v605 = vand.u32 %v31, 4294901760
    %606 = vmatpush1.msra.mxu0 %v605
    %607 = vmatprep.subr.mxu0 0.0
    %v608 = vand.u32 %v32, 4294901760
    %609 = vmatpush1.msra.mxu0 %v608
    %610 = vmatprep.subr.mxu0 0.0
    %v611 = vand.u32 %v33, 4294901760
    %612 = vmatpush1.msra.mxu0 %v611
    %613 = vmatprep.subr.mxu0 0.0
    %v614 = vand.u32 %v34, 4294901760
    %615 = vmatpush1.msra.mxu0 %v614
    %616 = vmatprep.subr.mxu0 0.0
    %v617 = vand.u32 %v35, 4294901760
    %618 = vmatpush1.msra.mxu0 %v617
    %619 = vmatprep.subr.mxu0 0.0
    %v620 = vand.u32 %v36, 4294901760
    %621 = vmatpush1.msra.mxu0 %v620
    %622 = vmatprep.subr.mxu0 0.0
    %v623 = vand.u32 %v37, 4294901760
    %624 = vmatpush1.msra.mxu0 %v623
    %625 = vmatprep.subr.mxu0 0.0
    %v626 = vand.u32 %v38, 4294901760
    %627 = vmatpush1.msra.mxu0 %v626
    %628 = vmatprep.subr.mxu0 0.0
    %v629 = vand.u32 %v39, 4294901760
    %630 = vmatpush1.msra.mxu0 %v629
    %631 = vmatprep.subr.mxu0 0.0
    %v632 = vand.u32 %v40, 4294901760
    %633 = vmatpush1.msra.mxu0 %v632
    %634 = vmatprep.subr.mxu0 0.0
    %v635 = vand.u32 %v41, 4294901760
    %636 = vmatpush1.msra.mxu0 %v635
    %637 = vmatprep.subr.mxu0 0.0
    %v638 = vand.u32 %v42, 4294901760
    %639 = vmatpush1.msra.mxu0 %v638
    %640 = vmatprep.subr.mxu0 0.0
    %v641 = vand.u32 %v43, 4294901760
    %642 = vmatpush1.msra.mxu0 %v641
    %643 = vmatprep.subr.mxu0 0.0
    %v644 = vand.u32 %v44, 4294901760
    %645 = vmatpush1.msra.mxu0 %v644
    %646 = vmatprep.subr.mxu0 0.0
    %v647 = vand.u32 %v45, 4294901760
    %648 = vmatpush1.msra.mxu0 %v647
    %649 = vmatprep.subr.mxu0 0.0
    %v650 = vand.u32 %v46, 4294901760
    %651 = vmatpush1.msra.mxu0 %v650
    %652 = vmatprep.subr.mxu0 0.0
    %v653 = vand.u32 %v47, 4294901760
    %654 = vmatpush1.msra.mxu0 %v653
    %655 = vmatprep.subr.mxu0 0.0
    %v656 = vand.u32 %v48, 4294901760
    %657 = vmatpush1.msra.mxu0 %v656
    %658 = vmatprep.subr.mxu0 0.0
    %v659 = vand.u32 %v49, 4294901760
    %660 = vmatpush1.msra.mxu0 %v659
    %661 = vmatprep.subr.mxu0 0.0
    %v662 = vand.u32 %v50, 4294901760
    %663 = vmatpush1.msra.mxu0 %v662
    %664 = vmatprep.subr.mxu0 0.0
    %v665 = vand.u32 %v51, 4294901760
    %666 = vmatpush1.msra.mxu0 %v665
    %667 = vmatprep.subr.mxu0 0.0
    %v668 = vand.u32 %v52, 4294901760
    %669 = vmatpush1.msra.mxu0 %v668
    %670 = vmatprep.subr.mxu0 0.0
    %v671 = vand.u32 %v53, 4294901760
    %672 = vmatpush1.msra.mxu0 %v671
    %673 = vmatprep.subr.mxu0 0.0
    %v674 = vand.u32 %v54, 4294901760
    %675 = vmatpush1.msra.mxu0 %v674
    %676 = vmatprep.subr.mxu0 0.0
    %v677 = vand.u32 %v55, 4294901760
    %678 = vmatpush1.msra.mxu0 %v677
    %679 = vmatprep.subr.mxu0 0.0
    %v680 = vand.u32 %v56, 4294901760
    %681 = vmatpush1.msra.mxu0 %v680
    %682 = vmatprep.subr.mxu0 0.0
    %v683 = vand.u32 %v57, 4294901760
    %684 = vmatpush1.msra.mxu0 %v683
    %685 = vmatprep.subr.mxu0 0.0
    %v686 = vand.u32 %v58, 4294901760
    %687 = vmatpush1.msra.mxu0 %v686
    %688 = vmatprep.subr.mxu0 0.0
    %v689 = vand.u32 %v59, 4294901760
    %690 = vmatpush1.msra.mxu0 %v689
    %691 = vmatprep.subr.mxu0 0.0
    %v692 = vand.u32 %v60, 4294901760
    %693 = vmatpush1.msra.mxu0 %v692
    %694 = vmatprep.subr.mxu0 0.0
    %v695 = vand.u32 %v61, 4294901760
    %696 = vmatpush1.msra.mxu0 %v695
    %v697 = vand.u32 %v83, 4294901760
    %v698 = vsub.f32 %v83, %v697
    %v699 = vand.u32 %v698, 4294901760
    %700 = vmatprep.mubr.f32.mxu0 %v699
    %v701 = vand.u32 %v82, 4294901760
    %v702 = vsub.f32 %v82, %v701
    %v703 = vand.u32 %v702, 4294901760
    %704 = vmatmul.mubr.f32.gmra.mrb[0].mxu0 %v703
    %v705 = vpop.f32.mrb[0].mxu0
    %v706 = vadd.f32 %v589, %v705
    %v707 = vpop.f32.mrb[0].mxu0
    %v708 = vand.u32 %v85, 4294901760
    %v709 = vsub.f32 %v85, %v708
    %v710 = vand.u32 %v709, 4294901760
    %711 = vmatprep.mubr.f32.mxu0 %v710
    %v712 = vand.u32 %v84, 4294901760
    %v713 = vsub.f32 %v84, %v712
    %v714 = vand.u32 %v713, 4294901760
    %715 = vmatmul.mubr.f32.gmra.mrb[0].mxu0 %v714
    %v716 = vpop.f32.mrb[0].mxu0
    %v717 = vadd.f32 %v598, %v716
    %v718 = vpop.f32.mrb[0].mxu0
    %719 = vdwg.mxu0
    %720 = vmatprep.subr.mxu0 0.0
    %v721 = vand.u32 %v30, 4294901760
    %v722 = vsub.f32 %v30, %v721
    %v723 = vand.u32 %v722, 4294901760
    %724 = vmatpush1.msra.mxu0 %v723
    %725 = vmatprep.subr.mxu0 0.0
    %v726 = vand.u32 %v31, 4294901760
    %v727 = vsub.f32 %v31, %v726
    %v728 = vand.u32 %v727, 4294901760
    %729 = vmatpush1.msra.mxu0 %v728
    %730 = vmatprep.subr.mxu0 0.0
    %v731 = vand.u32 %v32, 4294901760
    %v732 = vsub.f32 %v32, %v731
    %v733 = vand.u32 %v732, 4294901760
    %734 = vmatpush1.msra.mxu0 %v733
    %735 = vmatprep.subr.mxu0 0.0
    %v736 = vand.u32 %v33, 4294901760
    %v737 = vsub.f32 %v33, %v736
    %v738 = vand.u32 %v737, 4294901760
    %739 = vmatpush1.msra.mxu0 %v738
    %740 = vmatprep.subr.mxu0 0.0
    %v741 = vand.u32 %v34, 4294901760
    %v742 = vsub.f32 %v34, %v741
    %v743 = vand.u32 %v742, 4294901760
    %744 = vmatpush1.msra.mxu0 %v743
    %745 = vmatprep.subr.mxu0 0.0
    %v746 = vand.u32 %v35, 4294901760
    %v747 = vsub.f32 %v35, %v746
    %v748 = vand.u32 %v747, 4294901760
    %749 = vmatpush1.msra.mxu0 %v748
    %750 = vmatprep.subr.mxu0 0.0
    %v751 = vand.u32 %v36, 4294901760
    %v752 = vsub.f32 %v36, %v751
    %v753 = vand.u32 %v752, 4294901760
    %754 = vmatpush1.msra.mxu0 %v753
    %755 = vmatprep.subr.mxu0 0.0
    %v756 = vand.u32 %v37, 4294901760
    %v757 = vsub.f32 %v37, %v756
    %v758 = vand.u32 %v757, 4294901760
    %759 = vmatpush1.msra.mxu0 %v758
    %760 = vmatprep.subr.mxu0 0.0
    %v761 = vand.u32 %v38, 4294901760
    %v762 = vsub.f32 %v38, %v761
    %v763 = vand.u32 %v762, 4294901760
    %764 = vmatpush1.msra.mxu0 %v763
    %765 = vmatprep.subr.mxu0 0.0
    %v766 = vand.u32 %v39, 4294901760
    %v767 = vsub.f32 %v39, %v766
    %v768 = vand.u32 %v767, 4294901760
    %769 = vmatpush1.msra.mxu0 %v768
    %770 = vmatprep.subr.mxu0 0.0
    %v771 = vand.u32 %v40, 4294901760
    %v772 = vsub.f32 %v40, %v771
    %v773 = vand.u32 %v772, 4294901760
    %774 = vmatpush1.msra.mxu0 %v773
    %775 = vmatprep.subr.mxu0 0.0
    %v776 = vand.u32 %v41, 4294901760
    %v777 = vsub.f32 %v41, %v776
    %v778 = vand.u32 %v777, 4294901760
    %779 = vmatpush1.msra.mxu0 %v778
    %780 = vmatprep.subr.mxu0 0.0
    %v781 = vand.u32 %v42, 4294901760
    %v782 = vsub.f32 %v42, %v781
    %v783 = vand.u32 %v782, 4294901760
    %784 = vmatpush1.msra.mxu0 %v783
    %785 = vmatprep.subr.mxu0 0.0
    %v786 = vand.u32 %v43, 4294901760
    %v787 = vsub.f32 %v43, %v786
    %v788 = vand.u32 %v787, 4294901760
    %789 = vmatpush1.msra.mxu0 %v788
    %790 = vmatprep.subr.mxu0 0.0
    %v791 = vand.u32 %v44, 4294901760
    %v792 = vsub.f32 %v44, %v791
    %v793 = vand.u32 %v792, 4294901760
    %794 = vmatpush1.msra.mxu0 %v793
    %795 = vmatprep.subr.mxu0 0.0
    %v796 = vand.u32 %v45, 4294901760
    %v797 = vsub.f32 %v45, %v796
    %v798 = vand.u32 %v797, 4294901760
    %799 = vmatpush1.msra.mxu0 %v798
    %800 = vmatprep.subr.mxu0 0.0
    %v801 = vand.u32 %v46, 4294901760
    %v802 = vsub.f32 %v46, %v801
    %v803 = vand.u32 %v802, 4294901760
    %804 = vmatpush1.msra.mxu0 %v803
    %805 = vmatprep.subr.mxu0 0.0
    %v806 = vand.u32 %v47, 4294901760
    %v807 = vsub.f32 %v47, %v806
    %v808 = vand.u32 %v807, 4294901760
    %809 = vmatpush1.msra.mxu0 %v808
    %810 = vmatprep.subr.mxu0 0.0
    %v811 = vand.u32 %v48, 4294901760
    %v812 = vsub.f32 %v48, %v811
    %v813 = vand.u32 %v812, 4294901760
    %814 = vmatpush1.msra.mxu0 %v813
    %815 = vmatprep.subr.mxu0 0.0
    %v816 = vand.u32 %v49, 4294901760
    %v817 = vsub.f32 %v49, %v816
    %v818 = vand.u32 %v817, 4294901760
    %819 = vmatpush1.msra.mxu0 %v818
    %820 = vmatprep.subr.mxu0 0.0
    %v821 = vand.u32 %v50, 4294901760
    %v822 = vsub.f32 %v50, %v821
    %v823 = vand.u32 %v822, 4294901760
    %824 = vmatpush1.msra.mxu0 %v823
    %825 = vmatprep.subr.mxu0 0.0
    %v826 = vand.u32 %v51, 4294901760
    %v827 = vsub.f32 %v51, %v826
    %v828 = vand.u32 %v827, 4294901760
    %829 = vmatpush1.msra.mxu0 %v828
    %830 = vmatprep.subr.mxu0 0.0
    %v831 = vand.u32 %v52, 4294901760
    %v832 = vsub.f32 %v52, %v831
    %v833 = vand.u32 %v832, 4294901760
    %834 = vmatpush1.msra.mxu0 %v833
    %835 = vmatprep.subr.mxu0 0.0
    %v836 = vand.u32 %v53, 4294901760
    %v837 = vsub.f32 %v53, %v836
    %v838 = vand.u32 %v837, 4294901760
    %839 = vmatpush1.msra.mxu0 %v838
    %840 = vmatprep.subr.mxu0 0.0
    %v841 = vand.u32 %v54, 4294901760
    %v842 = vsub.f32 %v54, %v841
    %v843 = vand.u32 %v842, 4294901760
    %844 = vmatpush1.msra.mxu0 %v843
    %845 = vmatprep.subr.mxu0 0.0
    %v846 = vand.u32 %v55, 4294901760
    %v847 = vsub.f32 %v55, %v846
    %v848 = vand.u32 %v847, 4294901760
    %849 = vmatpush1.msra.mxu0 %v848
    %850 = vmatprep.subr.mxu0 0.0
    %v851 = vand.u32 %v56, 4294901760
    %v852 = vsub.f32 %v56, %v851
    %v853 = vand.u32 %v852, 4294901760
    %854 = vmatpush1.msra.mxu0 %v853
    %855 = vmatprep.subr.mxu0 0.0
    %v856 = vand.u32 %v57, 4294901760
    %v857 = vsub.f32 %v57, %v856
    %v858 = vand.u32 %v857, 4294901760
    %859 = vmatpush1.msra.mxu0 %v858
    %860 = vmatprep.subr.mxu0 0.0
    %v861 = vand.u32 %v58, 4294901760
    %v862 = vsub.f32 %v58, %v861
    %v863 = vand.u32 %v862, 4294901760
    %864 = vmatpush1.msra.mxu0 %v863
    %865 = vmatprep.subr.mxu0 0.0
    %v866 = vand.u32 %v59, 4294901760
    %v867 = vsub.f32 %v59, %v866
    %v868 = vand.u32 %v867, 4294901760
    %869 = vmatpush1.msra.mxu0 %v868
    %870 = vmatprep.subr.mxu0 0.0
    %v871 = vand.u32 %v60, 4294901760
    %v872 = vsub.f32 %v60, %v871
    %v873 = vand.u32 %v872, 4294901760
    %874 = vmatpush1.msra.mxu0 %v873
    %875 = vmatprep.subr.mxu0 0.0
    %v876 = vand.u32 %v61, 4294901760
    %v877 = vsub.f32 %v61, %v876
    %v878 = vand.u32 %v877, 4294901760
    %879 = vmatpush1.msra.mxu0 %v878
    %v880 = vand.u32 %v83, 4294901760
    %881 = vmatprep.mubr.f32.mxu0 %v880
    %v882 = vand.u32 %v82, 4294901760
    %883 = vmatmul.mubr.f32.gmra.mrb[0].mxu0 %v882
    %v884 = vpop.f32.mrb[0].mxu0
    %v885 = vadd.f32 %v706, %v884
    %v886 = vpop.f32.mrb[0].mxu0
    %v887 = vand.u32 %v85, 4294901760
    %888 = vmatprep.mubr.f32.mxu0 %v887
    %v889 = vand.u32 %v84, 4294901760
    %890 = vmatmul.mubr.f32.gmra.mrb[0].mxu0 %v889
    %v891 = vpop.f32.mrb[0].mxu0
    %v892 = vadd.f32 %v717, %v891
    %v893 = vpop.f32.mrb[0].mxu0
    %894 = vdwg.mxu0
    %895 = vmatprep.subr.mxu0 0.0
    %v896 = vand.u32 %v30, 4294901760
    %897 = vmatpush1.msra.mxu0 %v896
    %898 = vmatprep.subr.mxu0 0.0
    %v899 = vand.u32 %v31, 4294901760
    %900 = vmatpush1.msra.mxu0 %v899
    %901 = vmatprep.subr.mxu0 0.0
    %v902 = vand.u32 %v32, 4294901760
    %903 = vmatpush1.msra.mxu0 %v902
    %904 = vmatprep.subr.mxu0 0.0
    %v905 = vand.u32 %v33, 4294901760
    %906 = vmatpush1.msra.mxu0 %v905
    %907 = vmatprep.subr.mxu0 0.0
    %v908 = vand.u32 %v34, 4294901760
    %909 = vmatpush1.msra.mxu0 %v908
    %910 = vmatprep.subr.mxu0 0.0
    %v911 = vand.u32 %v35, 4294901760
    %912 = vmatpush1.msra.mxu0 %v911
    %913 = vmatprep.subr.mxu0 0.0
    %v914 = vand.u32 %v36, 4294901760
    %915 = vmatpush1.msra.mxu0 %v914
    %916 = vmatprep.subr.mxu0 0.0
    %v917 = vand.u32 %v37, 4294901760
    %918 = vmatpush1.msra.mxu0 %v917
    %919 = vmatprep.subr.mxu0 0.0
    %v920 = vand.u32 %v38, 4294901760
    %921 = vmatpush1.msra.mxu0 %v920
    %922 = vmatprep.subr.mxu0 0.0
    %v923 = vand.u32 %v39, 4294901760
    %924 = vmatpush1.msra.mxu0 %v923
    %925 = vmatprep.subr.mxu0 0.0
    %v926 = vand.u32 %v40, 4294901760
    %927 = vmatpush1.msra.mxu0 %v926
    %928 = vmatprep.subr.mxu0 0.0
    %v929 = vand.u32 %v41, 4294901760
    %930 = vmatpush1.msra.mxu0 %v929
    %931 = vmatprep.subr.mxu0 0.0
    %v932 = vand.u32 %v42, 4294901760
    %933 = vmatpush1.msra.mxu0 %v932
    %934 = vmatprep.subr.mxu0 0.0
    %v935 = vand.u32 %v43, 4294901760
    %936 = vmatpush1.msra.mxu0 %v935
    %937 = vmatprep.subr.mxu0 0.0
    %v938 = vand.u32 %v44, 4294901760
    %939 = vmatpush1.msra.mxu0 %v938
    %940 = vmatprep.subr.mxu0 0.0
    %v941 = vand.u32 %v45, 4294901760
    %942 = vmatpush1.msra.mxu0 %v941
    %943 = vmatprep.subr.mxu0 0.0
    %v944 = vand.u32 %v46, 4294901760
    %945 = vmatpush1.msra.mxu0 %v944
    %946 = vmatprep.subr.mxu0 0.0
    %v947 = vand.u32 %v47, 4294901760
    %948 = vmatpush1.msra.mxu0 %v947
    %949 = vmatprep.subr.mxu0 0.0
    %v950 = vand.u32 %v48, 4294901760
    %951 = vmatpush1.msra.mxu0 %v950
    %952 = vmatprep.subr.mxu0 0.0
    %v953 = vand.u32 %v49, 4294901760
    %954 = vmatpush1.msra.mxu0 %v953
    %955 = vmatprep.subr.mxu0 0.0
    %v956 = vand.u32 %v50, 4294901760
    %957 = vmatpush1.msra.mxu0 %v956
    %958 = vmatprep.subr.mxu0 0.0
    %v959 = vand.u32 %v51, 4294901760
    %960 = vmatpush1.msra.mxu0 %v959
    %961 = vmatprep.subr.mxu0 0.0
    %v962 = vand.u32 %v52, 4294901760
    %963 = vmatpush1.msra.mxu0 %v962
    %964 = vmatprep.subr.mxu0 0.0
    %v965 = vand.u32 %v53, 4294901760
    %966 = vmatpush1.msra.mxu0 %v965
    %967 = vmatprep.subr.mxu0 0.0
    %v968 = vand.u32 %v54, 4294901760
    %969 = vmatpush1.msra.mxu0 %v968
    %970 = vmatprep.subr.mxu0 0.0
    %v971 = vand.u32 %v55, 4294901760
    %972 = vmatpush1.msra.mxu0 %v971
    %973 = vmatprep.subr.mxu0 0.0
    %v974 = vand.u32 %v56, 4294901760
    %975 = vmatpush1.msra.mxu0 %v974
    %976 = vmatprep.subr.mxu0 0.0
    %v977 = vand.u32 %v57, 4294901760
    %978 = vmatpush1.msra.mxu0 %v977
    %979 = vmatprep.subr.mxu0 0.0
    %v980 = vand.u32 %v58, 4294901760
    %981 = vmatpush1.msra.mxu0 %v980
    %982 = vmatprep.subr.mxu0 0.0
    %v983 = vand.u32 %v59, 4294901760
    %984 = vmatpush1.msra.mxu0 %v983
    %985 = vmatprep.subr.mxu0 0.0
    %v986 = vand.u32 %v60, 4294901760
    %987 = vmatpush1.msra.mxu0 %v986
    %988 = vmatprep.subr.mxu0 0.0
    %v989 = vand.u32 %v61, 4294901760
    %990 = vmatpush1.msra.mxu0 %v989
    %v991 = vand.u32 %v83, 4294901760
    %992 = vmatprep.mubr.f32.mxu0 %v991
    %v993 = vand.u32 %v82, 4294901760
    %994 = vmatmul.mubr.f32.gmra.mrb[0].mxu0 %v993
    %v995 = vpop.f32.mrb[0].mxu0
    %v996 = vadd.f32 %v885, %v995
    %v997 = vpop.f32.mrb[0].mxu0
    %v998 = vand.u32 %v85, 4294901760
    %999 = vmatprep.mubr.f32.mxu0 %v998
    %v1000 = vand.u32 %v84, 4294901760
    %1001 = vmatmul.mubr.f32.gmra.mrb[0].mxu0 %v1000
    %v1002 = vpop.f32.mrb[0].mxu0
    %v1003 = vadd.f32 %v892, %v1002
    %v1004 = vpop.f32.mrb[0].mxu0
    %1005 = vdwg.mxu0
    %v1006 = vadd.f32 %v86, %v996
    %v1007 = vadd.f32 %v87, %v1003
    %1008 = vst [vmem:[#allocation2] sm:$0xff] %v1006
    %1009 = vst [vmem:[#allocation2 + $0x8] sm:$0xff] %v1007
    %v1010 = vld [vmem:[#allocation2] sm:$0xff]
    %v1011 = vld [vmem:[#allocation2 + $0x8] sm:$0xff]
    %1012 = vst [vmem:[#allocation6] sm:$0xff] %v1010
    %1013 = vst [vmem:[#allocation6 + $0x8] sm:$0xff] %v1011
    // Predicated region
    $region14: #{tpu_custom_call.1} parent=1 // pred_check
      _
    $region15: #{tpu_custom_call.1} parent=1 // pred_check_branch
      %1015 = sbr.rel (0) target = $region17
    $region16: #{tpu_custom_call.1} parent=1 // pred_region
      %s1017 = ssub.s32 256, 256
      %1018 = vsyncadd [#allocation5], %s1017
      %s1019 = sshll.u32 [#allocation6], 4
      %s1020 = int_to_ptr.vmem [resolvable:$true] %s1019
      %1025 = dma.vmem_to_hbm [thread:$0]  %s1020, 256, %s2, [#allocation5], 128, 128, 8
    $region17: #{tpu_custom_call.1} parent=1 // pred_fallthru
      _
    // Predicated region
    $region18: #{tpu_custom_call.1} parent=1 // pred_check
      _
    $region19: #{tpu_custom_call.1} parent=1 // pred_check_branch
      %1027 = sbr.rel (0) target = $region21
    $region20: #{tpu_custom_call.1} parent=1 // pred_region
      %1028 = dma.done [#allocation5], 256
    $region21: #{tpu_custom_call.1} parent=1 // pred_fallthru
      _
    %1029 = vsyncpa [#allocation4], 1
    %1030 = vsyncpa [#allocation5], 1

</llo_original>
